<compile_context>
chip_gen: v5e
topology: v5e:2x2
jax: 0.10.0
libtpu: 0.0.40
codegen_flags: <defaults>
</compile_context>

<pallas_src>
import math
import numpy as np
import jax
import jax.numpy as jnp
from jax.experimental import pallas as pl
from jax.experimental.pallas import tpu as pltpu


def _silu_norm_const() -> float:
    """normalize2mom(silu).cst = 1 / sqrt(E[silu(z)^2]), z ~ N(0,1).

    Deterministic fine composite-trapezoid quadrature (NumPy 2.x removed
    np.trapz, so the rule is written out explicitly).
    """
    x = np.linspace(-12.0, 12.0, 200001, dtype=np.float64)
    silu = x / (1.0 + np.exp(-x))
    pdf = np.exp(-0.5 * x * x) / math.sqrt(2.0 * math.pi)
    integrand = silu * silu * pdf
    dx = float(x[1] - x[0])
    second_moment = dx * (float(integrand.sum()) - 0.5 * float(integrand[0] + integrand[-1]))
    return float(1.0 / math.sqrt(second_moment))


def prescale_weights(weights, nonlin_const):
    """Fold (norm_from_last / sqrt(h_in)) into the weights once, outside the kernel."""
    num_layers = len(weights)
    scaled = []
    norm_from_last = 1.0
    for l, w in enumerate(weights):
        h_in = w.shape[0]
        scaled.append(w * (norm_from_last / math.sqrt(float(h_in))))
        if l < num_layers - 1:
            norm_from_last = nonlin_const
    return scaled


def pack_weights_blockdiag(scaled_weights, pack):
    """Replicate each scaled weight `pack` times block-diagonally.

    With x reshaped (N, d_in) -> (N/pack, pack*d_in) row-major, multiplying by
    kron(I_pack, W) applies W independently to each of the `pack` original rows
    carried in one packed row, so the whole MLP becomes lane-dense.
    Done once at setup time; the (small) dense block-diag weights live in VMEM.
    """
    return [jnp.kron(jnp.eye(pack, dtype=w.dtype), w) for w in scaled_weights]


def _make_mlp_kernel(num_layers):
    """Kernel body: whole MLP for one (tm, d_in_packed) row tile, weights resident."""

    def kernel(*refs):
        # refs = (x_ref, w0_ref, ..., w{L-1}_ref, o_ref)
        x_ref = refs[0]
        w_refs = refs[1:1 + num_layers]
        o_ref = refs[-1]

        h = x_ref[...]
        for l in range(num_layers):
            w = w_refs[l][...]
            # MXU matmul in the storage dtype (bf16 or f32), f32 accumulation.
            h = jnp.dot(h.astype(w.dtype), w, preferred_element_type=jnp.float32)
            if l < num_layers - 1:
                # SiLU = x*sigmoid(x) in f32 (sigmoid lowers to the EUP slot;
                # v5e has no bf16 VPU/EUP path).
                h = h * jax.nn.sigmoid(h)
        o_ref[...] = h.astype(o_ref.dtype)

    return kernel


def _choose_tm(rows, dims, itemsize, vmem_budget_bytes, max_tm=1024):
    """Pick the packed-row tile size.

    * Largest tile that fits the VMEM budget (double-buffered in/out tiles +
      f32 intermediates), capped at max_tm=1024 rows (512-1024 already hits
      ~85% of the HBM roofline; bigger only bloats live vregs / spills).
    * For large row counts: an EVEN number of grid steps >= 4, so v7x's two
      TensorCores ("parallel" axis) each get >= 2 steps and keep intra-core
      DMA/compute overlap.
    * tm is a multiple of 16 (legal sublane tiling for f32 and bf16), unless
      rows <= 16 (full-dim block is exempt from the 8/16 rule).
    """
    if rows <= 16:
        return int(rows)
    d_in, d_out, d_max = dims[0], dims[-1], max(dims)
    per_row = 2 * (d_in + d_out) * itemsize + 3 * d_max * 4
    tm = int(min(max_tm, max(16, vmem_budget_bytes // max(per_row, 1))))
    if rows >= 512:
        steps = max(4, pl.cdiv(rows, tm))
        steps += steps % 2                      # even -> >= 2 steps per v7x core
        tm = pl.cdiv(rows, steps)
    tm = max(16, ((tm + 15) // 16) * 16)        # multiple of 16
    tm = min(tm, max(16, (rows // 16) * 16))    # don't exceed rows (rounded to 16)
    return int(tm)


def scalar_mlp_forward(x, packed_weights, *, pack=8, tm=None,
                       vmem_budget_bytes=24 << 20, storage_dtype=None):
    """Run the full MLP in one pallas_call, tiled over the packed-row dimension.

    `packed_weights` are the block-diagonal weights from pack_weights_blockdiag.
    `storage_dtype=jnp.bfloat16` is recommended on v6e/v7x (bf16-native MXU,
    halved DMA traffic); accumulation and SiLU stay f32 either way.
    """
    N, d_in = x.shape
    num_layers = len(packed_weights)
    d_in_p = packed_weights[0].shape[0]
    d_out_p = packed_weights[-1].shape[1]
    assert d_in_p == pack * d_in, "packed weights do not match pack*d_in"
    d_out = d_out_p // pack
    dims_p = [d_in_p] + [w.shape[1] for w in packed_weights]

    if storage_dtype is not None:
        x = x.astype(storage_dtype)
        packed_weights = [w.astype(storage_dtype) for w in packed_weights]
    itemsize = x.dtype.itemsize

    # Pad the batch to a multiple of `pack` with zeros (silu(0)=0 -> no NaN in
    # the padded rows), then lane-pack with a free row-major reshape.
    n_pad = (-N) % pack
    if n_pad:
        x = jnp.pad(x, ((0, n_pad), (0, 0)))
    rows = (N + n_pad) // pack
    x_packed = x.reshape(rows, d_in_p)

    if tm is None:
        tm = _choose_tm(rows, dims_p, itemsize, vmem_budget_bytes)
    tm = int(min(tm, rows))                    # full-dim block if tile > rows
    grid = (pl.cdiv(rows, tm),)                # ragged last block computed-and-dropped

    in_specs = [pl.BlockSpec((tm, d_in_p), lambda i: (i, 0))]
    for w in packed_weights:
        hi, ho = w.shape
        # Constant index_map: full weight block stays resident across grid steps.
        in_specs.append(pl.BlockSpec((hi, ho), lambda i: (0, 0)))
    out_spec = pl.BlockSpec((tm, d_out_p), lambda i: (i, 0))

    # VMEM cap: actual footprint with 2x headroom, never above 32 MiB
    # (v7x physical VMEM is only 64 MiB).
    w_bytes = sum(int(w.size) * w.dtype.itemsize for w in packed_weights)
    tile_bytes = 2 * tm * (d_in_p + d_out_p) * itemsize
    inter_bytes = 3 * tm * max(dims_p) * 4
    vmem_limit = int(min(32 << 20, max(16 << 20, 2 * (w_bytes + tile_bytes + inter_bytes))))

    flops = 2 * rows * sum(a * b for a, b in zip(dims_p[:-1], dims_p[1:]))
    transcendentals = rows * sum(dims_p[1:-1])
    bytes_accessed = (rows * d_in_p * itemsize + w_bytes + rows * d_out_p * itemsize)

    out_packed = pl.pallas_call(
        _make_mlp_kernel(num_layers),
        out_shape=jax.ShapeDtypeStruct((rows, d_out_p), x.dtype),
        grid_spec=pltpu.PrefetchScalarGridSpec(
            num_scalar_prefetch=0,
            grid=grid,
            in_specs=in_specs,
            out_specs=out_spec,
        ),
        compiler_params=pltpu.CompilerParams(
            dimension_semantics=("parallel",),   # batch axis shards across v7x cores
            vmem_limit_bytes=vmem_limit,
        ),
        cost_estimate=pl.CostEstimate(
            flops=flops,
            transcendentals=transcendentals,
            bytes_accessed=bytes_accessed,
        ),
    )(x_packed, *packed_weights)

    out = out_packed.reshape(rows * pack, d_out)   # free reshape back
    if n_pad:
        out = out[:N]
    return out


def scalar_mlp_reference(x, scaled_weights):
    """Pure-JAX reference on the UNPACKED scaled weights (f32 math)."""
    h = x.astype(jnp.float32)
    num_layers = len(scaled_weights)
    for l, w in enumerate(scaled_weights):
        h = h @ w.astype(jnp.float32)
        if l < num_layers - 1:
            h = jax.nn.silu(h)
    return h


if __name__ == "__main__":
    # ScalarMLPFunction(mlp_input_dimension=32, mlp_latent_dimensions=[64, 64],
    #                   mlp_output_dimension=16, mlp_nonlinearity='silu',
    #                   mlp_initialization='normal')
    dimensions = [32, 64, 64, 16]
    num_layers = len(dimensions) - 1
    cst = _silu_norm_const()

    key = jax.random.PRNGKey(0)
    keys = jax.random.split(key, num_layers + 1)
    weights = [
        jax.random.normal(keys[l], (dimensions[l], dimensions[l + 1]), dtype=jnp.float32)
        for l in range(num_layers)
    ]
    # Fold the e3nn-style normalization scales into the parameters, then lane-pack.
    w_scaled = prescale_weights(weights, cst)
    PACK = 8
    w_packed = pack_weights_blockdiag(w_scaled, PACK)            # (256,512),(512,512),(512,128)
    w_packed_bf16 = [w.astype(jnp.bfloat16) for w in w_packed]

    N = 256
    x = jax.random.normal(keys[-1], (N, dimensions[0]), dtype=jnp.float32)

    # --- f32 storage path, auto-chosen tile, lane-packed layout -----------
    out = jax.block_until_ready(scalar_mlp_forward(x, w_packed, pack=PACK))
    ref = scalar_mlp_reference(x, w_scaled)
    assert out.shape == (N, dimensions[-1])
    assert jnp.allclose(out, ref, atol=1e-4, rtol=1e-4), "f32 mismatch vs reference"

    # --- bf16 storage path (recommended on v6e/v7x): bf16 MXU, f32 accumulate
    out_b = jax.block_until_ready(
        scalar_mlp_forward(x, w_packed_bf16, pack=PACK, storage_dtype=jnp.bfloat16))
    assert jnp.allclose(out_b.astype(jnp.float32), ref, atol=5e-2, rtol=5e-2), \
        "bf16 mismatch vs reference"

    # --- ragged batch: N not a multiple of the pack factor or the tile ----
    N2 = 203
    x2 = jax.random.normal(jax.random.PRNGKey(1), (N2, dimensions[0]), dtype=jnp.float32)
    out2 = jax.block_until_ready(scalar_mlp_forward(x2, w_packed, pack=PACK, tm=16))
    ref2 = scalar_mlp_reference(x2, w_scaled)
    assert out2.shape == (N2, dimensions[-1])
    assert jnp.allclose(out2, ref2, atol=1e-4, rtol=1e-4), "ragged-batch mismatch"

    print("KERNEL_OK")
</pallas_src>

<mosaic_0001>
module attributes {stable_mosaic.version = 11 : i64} {
  func.func @kernel(%arg0: i32, %arg1: memref<32x256xf32, #tpu.memory_space<vmem>>, %arg2: memref<256x512xf32, #tpu.memory_space<vmem>>, %arg3: memref<512x512xf32, #tpu.memory_space<vmem>>, %arg4: memref<512x128xf32, #tpu.memory_space<vmem>>, %arg5: memref<32x128xf32, #tpu.memory_space<vmem>>) attributes {dimension_semantics = [#tpu.dimension_semantics<parallel>], iteration_bounds = array<i64: 1>, scalar_prefetch = 0 : i64, scratch_operands = 0 : i64, tpu.core_type = #tpu.core_type<tc>, window_params = [{transform_indices = @transform_0, window_bounds = array<i64: 32, 256>}, {pipeline_mode = #tpu.pipeline_mode<synchronous>, transform_indices = @transform_1, window_bounds = array<i64: 256, 512>}, {pipeline_mode = #tpu.pipeline_mode<synchronous>, transform_indices = @transform_2, window_bounds = array<i64: 512, 512>}, {pipeline_mode = #tpu.pipeline_mode<synchronous>, transform_indices = @transform_3, window_bounds = array<i64: 512, 128>}, {transform_indices = @transform_4, window_bounds = array<i64: 32, 128>}]} {
    %c0 = arith.constant 0 : index
    %c0_0 = arith.constant 0 : index
    %0 = vector.load %arg1[%c0, %c0_0] : memref<32x256xf32, #tpu.memory_space<vmem>>, vector<32x256xf32>
    %c0_1 = arith.constant 0 : index
    %c0_2 = arith.constant 0 : index
    %1 = vector.load %arg2[%c0_1, %c0_2] : memref<256x512xf32, #tpu.memory_space<vmem>>, vector<256x512xf32>
    %cst = arith.constant dense<0.000000e+00> : vector<32x512xf32>
    %2 = tpu.matmul %0, %1, %cst {dimension_numbers = #tpu.dot_dimension_numbers<[1], [0], [0], [1], [0, 0, 1, 1], [], []>} : vector<32x256xf32>, vector<256x512xf32>, vector<32x512xf32> -> vector<32x512xf32>
    %3 = arith.negf %2 : vector<32x512xf32>
    %4 = math.exp %3 : vector<32x512xf32>
    %cst_3 = arith.constant 1.000000e+00 : f32
    %5 = vector.broadcast %cst_3 : f32 to vector<32x512xf32>
    %6 = arith.addf %5, %4 : vector<32x512xf32>
    %7 = arith.divf %5, %6 : vector<32x512xf32>
    %8 = arith.mulf %2, %7 : vector<32x512xf32>
    %c0_4 = arith.constant 0 : index
    %c0_5 = arith.constant 0 : index
    %9 = vector.load %arg3[%c0_4, %c0_5] : memref<512x512xf32, #tpu.memory_space<vmem>>, vector<512x512xf32>
    %cst_6 = arith.constant dense<0.000000e+00> : vector<32x512xf32>
    %10 = tpu.matmul %8, %9, %cst_6 {dimension_numbers = #tpu.dot_dimension_numbers<[1], [0], [0], [1], [0, 0, 1, 1], [], []>} : vector<32x512xf32>, vector<512x512xf32>, vector<32x512xf32> -> vector<32x512xf32>
    %11 = arith.negf %10 : vector<32x512xf32>
    %12 = math.exp %11 : vector<32x512xf32>
    %cst_7 = arith.constant 1.000000e+00 : f32
    %13 = vector.broadcast %cst_7 : f32 to vector<32x512xf32>
    %14 = arith.addf %13, %12 : vector<32x512xf32>
    %15 = arith.divf %13, %14 : vector<32x512xf32>
    %16 = arith.mulf %10, %15 : vector<32x512xf32>
    %c0_8 = arith.constant 0 : index
    %c0_9 = arith.constant 0 : index
    %17 = vector.load %arg4[%c0_8, %c0_9] : memref<512x128xf32, #tpu.memory_space<vmem>>, vector<512x128xf32>
    %cst_10 = arith.constant dense<0.000000e+00> : vector<32x128xf32>
    %18 = tpu.matmul %16, %17, %cst_10 {dimension_numbers = #tpu.dot_dimension_numbers<[1], [0], [0], [1], [0, 0, 1, 1], [], []>} : vector<32x512xf32>, vector<512x128xf32>, vector<32x128xf32> -> vector<32x128xf32>
    %c0_11 = arith.constant 0 : index
    %c0_12 = arith.constant 0 : index
    %19 = vector.load %arg5[%c0_11, %c0_12] : memref<32x128xf32, #tpu.memory_space<vmem>>, vector<32x128xf32>
    tpu.vector_store %arg5[%c0_11, %c0_12], %18 {strides = array<i32>} : memref<32x128xf32, #tpu.memory_space<vmem>>, vector<32x128xf32>,
    return
  }
  func.func @transform_0(%arg0: i32) -> (i32, i32) {
    %c0_i32 = arith.constant 0 : i32
    %c0_i32_0 = arith.constant 0 : i32
    return %arg0, %c0_i32 : i32, i32
  }
  func.func @transform_1(%arg0: i32) -> (i32, i32) {
    %c0_i32 = arith.constant 0 : i32
    %c0_i32_0 = arith.constant 0 : i32
    %c0_i32_1 = arith.constant 0 : i32
    return %c0_i32, %c0_i32_0 : i32, i32
  }
  func.func @transform_2(%arg0: i32) -> (i32, i32) {
    %c0_i32 = arith.constant 0 : i32
    %c0_i32_0 = arith.constant 0 : i32
    %c0_i32_1 = arith.constant 0 : i32
    return %c0_i32, %c0_i32_0 : i32, i32
  }
  func.func @transform_3(%arg0: i32) -> (i32, i32) {
    %c0_i32 = arith.constant 0 : i32
    %c0_i32_0 = arith.constant 0 : i32
    %c0_i32_1 = arith.constant 0 : i32
    return %c0_i32, %c0_i32_0 : i32, i32
  }
  func.func @transform_4(%arg0: i32) -> (i32, i32) {
    %c0_i32 = arith.constant 0 : i32
    %c0_i32_0 = arith.constant 0 : i32
    return %arg0, %c0_i32 : i32, i32
  }
}

</mosaic_0001>

<llo_original>
// kernel: tpu_custom_call.1
$region0: #{tpu_custom_call.1}
  #allocation0 [shape = 'u32[]', space=smem, size = 0x4, offset = 0x4, fixed_abs, tag = 'smem constant byte address 0x4 - core index']
  #allocation1 [shape = 'u32[72,128]{1,0:T(1,128)}', space=vmem, size = 0x9000, scoped, tag = 'internal scratch']
  %s0 = inlined_call_operand.hbm [shape: f32[32,256], index: 0, kind: input, shape index: {}]
  %s1 = inlined_call_operand.hbm [shape: f32[256,512], index: 1, kind: input, shape index: {}]
  %s2 = inlined_call_operand.hbm [shape: f32[512,512], index: 2, kind: input, shape index: {}]
  %s3 = inlined_call_operand.hbm [shape: f32[512,128], index: 3, kind: input, shape index: {}]
  %s4 = inlined_call_operand.hbm [shape: f32[32,128], index: 4, kind: output, shape index: {}]
  %s5 = sld [smem:[#allocation0]]
  $region42: #{tpu_custom_call.1} parent=0
    _
  %s7 = ssub.s32 1, %s5
  %s8 = scalar_select 0, %s7, %s5
  $region1: #{tpu_custom_call.1} parent=0
    #allocation2 [shape = 'u8[32768]{0}', space=vmem, size = 0x8000, scoped, tag = 'input window, operand 0, single buffered']
    #allocation3 [shape = 's32[1]{0}', space=sflag, size = 0x4, scoped, tag = 'scoped memory for tpu_custom_call.1']
    #allocation4 [shape = 's32[1]{0}', space=sflag, size = 0x4, scoped, tag = 'scoped memory for tpu_custom_call.1']
    #allocation5 [shape = 'u8[524288]{0}', space=vmem, size = 0x80000, scoped, tag = 'input window, operand 1, single buffered']
    #allocation6 [shape = 's32[1]{0}', space=sflag, size = 0x4, scoped, tag = 'scoped memory for tpu_custom_call.1']
    #allocation7 [shape = 'u8[1048576]{0}', space=vmem, size = 0x100000, scoped, tag = 'input window, operand 2, single buffered']
    #allocation8 [shape = 'u8[262144]{0}', space=vmem, size = 0x40000, scoped, tag = 'input window, operand 3, single buffered']
    #allocation9 [shape = 's32[1]{0}', space=sflag, size = 0x4, scoped, tag = 'scoped memory for tpu_custom_call.1']
    #allocation10 [shape = 'u8[16384]{0}', space=vmem, size = 0x4000, scoped, tag = 'output window, operand 0, single buffered']
    %9 = vsyncpa [#allocation3], 0
    %10 = vsyncpa [#allocation6], 0
    %11 = vsyncpa [#allocation9], 0
    %12 = vsyncpa [#allocation4], 0
    // Predicated region
    $region2: #{tpu_custom_call.1} parent=1 // pred_check
      _
    $region3: #{tpu_custom_call.1} parent=1 // pred_check_branch
      %14 = sbr.rel (0) target = $region5
    $region4: #{tpu_custom_call.1} parent=1 // pred_region
      %16 = vsyncadd [#allocation3], 0
      %s17 = sshll.u32 %s0, 4
      %s18 = int_to_ptr.hbm [resolvable:$true] %s17
      %s19 = sshll.u32 [#allocation2], 4
      %s20 = int_to_ptr.vmem [resolvable:$true] %s19
      %25 = dma.hbm_to_vmem [thread:$0]  %s18, 1024, %s20, [#allocation3], 256, 256, 16
    $region5: #{tpu_custom_call.1} parent=1 // pred_fallthru
      _
    // Predicated region
    $region6: #{tpu_custom_call.1} parent=1 // pred_check
      _
    $region7: #{tpu_custom_call.1} parent=1 // pred_check_branch
      %27 = sbr.rel (0) target = $region9
    $region8: #{tpu_custom_call.1} parent=1 // pred_region
      %29 = vsyncadd [#allocation6], 0
      %s30 = sshll.u32 %s1, 4
      %s31 = int_to_ptr.hbm [resolvable:$true] %s30
      %s32 = sshll.u32 [#allocation5], 4
      %s33 = int_to_ptr.vmem [resolvable:$true] %s32
      %38 = dma.hbm_to_vmem [thread:$0]  %s31, 16384, %s33, [#allocation6], 512, 512, 32
    $region9: #{tpu_custom_call.1} parent=1 // pred_fallthru
      _
    // Predicated region
    $region10: #{tpu_custom_call.1} parent=1 // pred_check
      _
    $region11: #{tpu_custom_call.1} parent=1 // pred_check_branch
      %40 = sbr.rel (0) target = $region13
    $region12: #{tpu_custom_call.1} parent=1 // pred_region
      %42 = vsyncadd [#allocation6], 0
      %s43 = sshll.u32 %s2, 4
      %s44 = int_to_ptr.hbm [resolvable:$true] %s43
      %s45 = sshll.u32 [#allocation7], 4
      %s46 = int_to_ptr.vmem [resolvable:$true] %s45
      %51 = dma.hbm_to_vmem [thread:$0]  %s44, 32768, %s46, [#allocation6], 512, 512, 32
    $region13: #{tpu_custom_call.1} parent=1 // pred_fallthru
      _
    // Predicated region
    $region14: #{tpu_custom_call.1} parent=1 // pred_check
      _
    $region15: #{tpu_custom_call.1} parent=1 // pred_check_branch
      %53 = sbr.rel (0) target = $region17
    $region16: #{tpu_custom_call.1} parent=1 // pred_region
      %55 = vsyncadd [#allocation9], 0
      %s56 = sshll.u32 %s3, 4
      %s57 = int_to_ptr.hbm [resolvable:$true] %s56
      %s58 = sshll.u32 [#allocation8], 4
      %s59 = int_to_ptr.vmem [resolvable:$true] %s58
      %64 = dma.hbm_to_vmem [thread:$0]  %s57, 8192, %s59, [#allocation9], 128, 128, 8
    $region17: #{tpu_custom_call.1} parent=1 // pred_fallthru
      _
    // Predicated region
    $region18: #{tpu_custom_call.1} parent=1 // pred_check
      _
    $region19: #{tpu_custom_call.1} parent=1 // pred_check_branch
      %66 = sbr.rel (0) target = $region21
    $region20: #{tpu_custom_call.1} parent=1 // pred_region
      %68 = dma.done [#allocation3], 1024
    $region21: #{tpu_custom_call.1} parent=1 // pred_fallthru
      _
    // Predicated region
    $region22: #{tpu_custom_call.1} parent=1 // pred_check
      _
    $region23: #{tpu_custom_call.1} parent=1 // pred_check_branch
      %70 = sbr.rel (0) target = $region25
    $region24: #{tpu_custom_call.1} parent=1 // pred_region
      %72 = dma.done [#allocation6], 16384
    $region25: #{tpu_custom_call.1} parent=1 // pred_fallthru
      _
    // Predicated region
    $region26: #{tpu_custom_call.1} parent=1 // pred_check
      _
    $region27: #{tpu_custom_call.1} parent=1 // pred_check_branch
      %74 = sbr.rel (0) target = $region29
    $region28: #{tpu_custom_call.1} parent=1 // pred_region
      %76 = dma.done [#allocation6], 32768
    $region29: #{tpu_custom_call.1} parent=1 // pred_fallthru
      _
    // Predicated region
    $region30: #{tpu_custom_call.1} parent=1 // pred_check
      _
    $region31: #{tpu_custom_call.1} parent=1 // pred_check_branch
      %78 = sbr.rel (0) target = $region33
    $region32: #{tpu_custom_call.1} parent=1 // pred_region
      %80 = dma.done [#allocation9], 8192
    $region33: #{tpu_custom_call.1} parent=1 // pred_fallthru
      _
    %v81 = vld [vmem:[#allocation2] sm:$0xff]
    %v82 = vld [vmem:[#allocation2 + $0x8] sm:$0xff]
    %v83 = vld [vmem:[#allocation2 + $0x10] sm:$0xff]
    %v84 = vld [vmem:[#allocation2 + $0x18] sm:$0xff]
    %v85 = vld [vmem:[#allocation2 + $0x20] sm:$0xff]
    %v86 = vld [vmem:[#allocation2 + $0x28] sm:$0xff]
    %v87 = vld [vmem:[#allocation2 + $0x30] sm:$0xff]
    %v88 = vld [vmem:[#allocation2 + $0x38] sm:$0xff]
    %v89 = vld [vmem:[#allocation5] sm:$0xff]
    %v90 = vld [vmem:[#allocation5 + $0x8] sm:$0xff]
    %v91 = vld [vmem:[#allocation5 + $0x10] sm:$0xff]
    %v92 = vld [vmem:[#allocation5 + $0x18] sm:$0xff]
    %v93 = vld [vmem:[#allocation5 + $0x20] sm:$0xff]
    %v94 = vld [vmem:[#allocation5 + $0x28] sm:$0xff]
    %v95 = vld [vmem:[#allocation5 + $0x30] sm:$0xff]
    %v96 = vld [vmem:[#allocation5 + $0x38] sm:$0xff]
    %v97 = vld [vmem:[#allocation5 + $0x40] sm:$0xff]
    %v98 = vld [vmem:[#allocation5 + $0x48] sm:$0xff]
    %v99 = vld [vmem:[#allocation5 + $0x50] sm:$0xff]
    %v100 = vld [vmem:[#allocation5 + $0x58] sm:$0xff]
    %v101 = vld [vmem:[#allocation5 + $0x60] sm:$0xff]
    %v102 = vld [vmem:[#allocation5 + $0x68] sm:$0xff]
    %v103 = vld [vmem:[#allocation5 + $0x70] sm:$0xff]
    %v104 = vld [vmem:[#allocation5 + $0x78] sm:$0xff]
    %v105 = vld [vmem:[#allocation5 + $0x80] sm:$0xff]
    %v106 = vld [vmem:[#allocation5 + $0x88] sm:$0xff]
    %v107 = vld [vmem:[#allocation5 + $0x90] sm:$0xff]
    %v108 = vld [vmem:[#allocation5 + $0x98] sm:$0xff]
    %v109 = vld [vmem:[#allocation5 + $0xa0] sm:$0xff]
    %v110 = vld [vmem:[#allocation5 + $0xa8] sm:$0xff]
    %v111 = vld [vmem:[#allocation5 + $0xb0] sm:$0xff]
    %v112 = vld [vmem:[#allocation5 + $0xb8] sm:$0xff]
    %v113 = vld [vmem:[#allocation5 + $0xc0] sm:$0xff]
    %v114 = vld [vmem:[#allocation5 + $0xc8] sm:$0xff]
    %v115 = vld [vmem:[#allocation5 + $0xd0] sm:$0xff]
    %v116 = vld [vmem:[#allocation5 + $0xd8] sm:$0xff]
    %v117 = vld [vmem:[#allocation5 + $0xe0] sm:$0xff]
    %v118 = vld [vmem:[#allocation5 + $0xe8] sm:$0xff]
    %v119 = vld [vmem:[#allocation5 + $0xf0] sm:$0xff]
    %v120 = vld [vmem:[#allocation5 + $0xf8] sm:$0xff]
    %v121 = vld [vmem:[#allocation5 + $0x100] sm:$0xff]
    %v122 = vld [vmem:[#allocation5 + $0x108] sm:$0xff]
    %v123 = vld [vmem:[#allocation5 + $0x110] sm:$0xff]
    %v124 = vld [vmem:[#allocation5 + $0x118] sm:$0xff]
    %v125 = vld [vmem:[#allocation5 + $0x120] sm:$0xff]
    %v126 = vld [vmem:[#allocation5 + $0x128] sm:$0xff]
    %v127 = vld [vmem:[#allocation5 + $0x130] sm:$0xff]
    %v128 = vld [vmem:[#allocation5 + $0x138] sm:$0xff]
    %v129 = vld [vmem:[#allocation5 + $0x140] sm:$0xff]
    %v130 = vld [vmem:[#allocation5 + $0x148] sm:$0xff]
    %v131 = vld [vmem:[#allocation5 + $0x150] sm:$0xff]
    %v132 = vld [vmem:[#allocation5 + $0x158] sm:$0xff]
    %v133 = vld [vmem:[#allocation5 + $0x160] sm:$0xff]
    %v134 = vld [vmem:[#allocation5 + $0x168] sm:$0xff]
    %v135 = vld [vmem:[#allocation5 + $0x170] sm:$0xff]
    %v136 = vld [vmem:[#allocation5 + $0x178] sm:$0xff]
    %v137 = vld [vmem:[#allocation5 + $0x180] sm:$0xff]
    %v138 = vld [vmem:[#allocation5 + $0x188] sm:$0xff]
    %v139 = vld [vmem:[#allocation5 + $0x190] sm:$0xff]
    %v140 = vld [vmem:[#allocation5 + $0x198] sm:$0xff]
    %v141 = vld [vmem:[#allocation5 + $0x1a0] sm:$0xff]
    %v142 = vld [vmem:[#allocation5 + $0x1a8] sm:$0xff]
    %v143 = vld [vmem:[#allocation5 + $0x1b0] sm:$0xff]
    %v144 = vld [vmem:[#allocation5 + $0x1b8] sm:$0xff]
    %v145 = vld [vmem:[#allocation5 + $0x1c0] sm:$0xff]
    %v146 = vld [vmem:[#allocation5 + $0x1c8] sm:$0xff]
    %v147 = vld [vmem:[#allocation5 + $0x1d0] sm:$0xff]
    %v148 = vld [vmem:[#allocation5 + $0x1d8] sm:$0xff]
    %v149 = vld [vmem:[#allocation5 + $0x1e0] sm:$0xff]
    %v150 = vld [vmem:[#allocation5 + $0x1e8] sm:$0xff]
    %v151 = vld [vmem:[#allocation5 + $0x1f0] sm:$0xff]
    %v152 = vld [vmem:[#allocation5 + $0x1f8] sm:$0xff]
    %v153 = vld [vmem:[#allocation5 + $0x200] sm:$0xff]
    %v154 = vld [vmem:[#allocation5 + $0x208] sm:$0xff]
    %v155 = vld [vmem:[#allocation5 + $0x210] sm:$0xff]
    %v156 = vld [vmem:[#allocation5 + $0x218] sm:$0xff]
    %v157 = vld [vmem:[#allocation5 + $0x220] sm:$0xff]
    %v158 = vld [vmem:[#allocation5 + $0x228] sm:$0xff]
    %v159 = vld [vmem:[#allocation5 + $0x230] sm:$0xff]
    %v160 = vld [vmem:[#allocation5 + $0x238] sm:$0xff]
    %v161 = vld [vmem:[#allocation5 + $0x240] sm:$0xff]
    %v162 = vld [vmem:[#allocation5 + $0x248] sm:$0xff]
    %v163 = vld [vmem:[#allocation5 + $0x250] sm:$0xff]
    %v164 = vld [vmem:[#allocation5 + $0x258] sm:$0xff]
    %v165 = vld [vmem:[#allocation5 + $0x260] sm:$0xff]
    %v166 = vld [vmem:[#allocation5 + $0x268] sm:$0xff]
    %v167 = vld [vmem:[#allocation5 + $0x270] sm:$0xff]
    %v168 = vld [vmem:[#allocation5 + $0x278] sm:$0xff]
    %v169 = vld [vmem:[#allocation5 + $0x280] sm:$0xff]
    %v170 = vld [vmem:[#allocation5 + $0x288] sm:$0xff]
    %v171 = vld [vmem:[#allocation5 + $0x290] sm:$0xff]
    %v172 = vld [vmem:[#allocation5 + $0x298] sm:$0xff]
    %v173 = vld [vmem:[#allocation5 + $0x2a0] sm:$0xff]
    %v174 = vld [vmem:[#allocation5 + $0x2a8] sm:$0xff]
    %v175 = vld [vmem:[#allocation5 + $0x2b0] sm:$0xff]
    %v176 = vld [vmem:[#allocation5 + $0x2b8] sm:$0xff]
    %v177 = vld [vmem:[#allocation5 + $0x2c0] sm:$0xff]
    %v178 = vld [vmem:[#allocation5 + $0x2c8] sm:$0xff]
    %v179 = vld [vmem:[#allocation5 + $0x2d0] sm:$0xff]
    %v180 = vld [vmem:[#allocation5 + $0x2d8] sm:$0xff]
    %v181 = vld [vmem:[#allocation5 + $0x2e0] sm:$0xff]
    %v182 = vld [vmem:[#allocation5 + $0x2e8] sm:$0xff]
    %v183 = vld [vmem:[#allocation5 + $0x2f0] sm:$0xff]
    %v184 = vld [vmem:[#allocation5 + $0x2f8] sm:$0xff]
    %v185 = vld [vmem:[#allocation5 + $0x300] sm:$0xff]
    %v186 = vld [vmem:[#allocation5 + $0x308] sm:$0xff]
    %v187 = vld [vmem:[#allocation5 + $0x310] sm:$0xff]
    %v188 = vld [vmem:[#allocation5 + $0x318] sm:$0xff]
    %v189 = vld [vmem:[#allocation5 + $0x320] sm:$0xff]
    %v190 = vld [vmem:[#allocation5 + $0x328] sm:$0xff]
    %v191 = vld [vmem:[#allocation5 + $0x330] sm:$0xff]
    %v192 = vld [vmem:[#allocation5 + $0x338] sm:$0xff]
    %v193 = vld [vmem:[#allocation5 + $0x340] sm:$0xff]
    %v194 = vld [vmem:[#allocation5 + $0x348] sm:$0xff]
    %v195 = vld [vmem:[#allocation5 + $0x350] sm:$0xff]
    %v196 = vld [vmem:[#allocation5 + $0x358] sm:$0xff]
    %v197 = vld [vmem:[#allocation5 + $0x360] sm:$0xff]
    %v198 = vld [vmem:[#allocation5 + $0x368] sm:$0xff]
    %v199 = vld [vmem:[#allocation5 + $0x370] sm:$0xff]
    %v200 = vld [vmem:[#allocation5 + $0x378] sm:$0xff]
    %v201 = vld [vmem:[#allocation5 + $0x380] sm:$0xff]
    %v202 = vld [vmem:[#allocation5 + $0x388] sm:$0xff]
    %v203 = vld [vmem:[#allocation5 + $0x390] sm:$0xff]
    %v204 = vld [vmem:[#allocation5 + $0x398] sm:$0xff]
    %v205 = vld [vmem:[#allocation5 + $0x3a0] sm:$0xff]
    %v206 = vld [vmem:[#allocation5 + $0x3a8] sm:$0xff]
    %v207 = vld [vmem:[#allocation5 + $0x3b0] sm:$0xff]
    %v208 = vld [vmem:[#allocation5 + $0x3b8] sm:$0xff]
    %v209 = vld [vmem:[#allocation5 + $0x3c0] sm:$0xff]
    %v210 = vld [vmem:[#allocation5 + $0x3c8] sm:$0xff]
    %v211 = vld [vmem:[#allocation5 + $0x3d0] sm:$0xff]
    %v212 = vld [vmem:[#allocation5 + $0x3d8] sm:$0xff]
    %v213 = vld [vmem:[#allocation5 + $0x3e0] sm:$0xff]
    %v214 = vld [vmem:[#allocation5 + $0x3e8] sm:$0xff]
    %v215 = vld [vmem:[#allocation5 + $0x3f0] sm:$0xff]
    %v216 = vld [vmem:[#allocation5 + $0x3f8] sm:$0xff]
    %217 = vmatpush.msra.mxu0 %v149
    %218 = vmatpush.msra.mxu0 %v145
    %219 = vmatpush.msra.mxu0 %v141
    %220 = vmatpush.msra.mxu0 %v137
    %221 = vmatpush.msra.mxu0 %v133
    %222 = vmatpush.msra.mxu0 %v129
    %223 = vmatpush.msra.mxu0 %v125
    %224 = vmatpush.msra.mxu0 %v121
    %225 = vmatpush.msra.mxu0 %v117
    %226 = vmatpush.msra.mxu0 %v113
    %227 = vmatpush.msra.mxu0 %v109
    %228 = vmatpush.msra.mxu0 %v105
    %229 = vmatpush.msra.mxu0 %v101
    %230 = vmatpush.msra.mxu0 %v97
    %231 = vmatpush.msra.mxu0 %v93
    %232 = vmatpush.msra.mxu0 %v89
    %233 = vmatmul.f32.gmra.mxu0 %v81
    %v234 = vpop.f32.mrf.mxu0
    %v235 = vadd.f32 0.0, %v234
    %236 = vmatmul.f32.gmra.mxu0 %v83
    %v237 = vpop.f32.mrf.mxu0
    %v238 = vadd.f32 0.0, %v237
    %239 = vmatmul.f32.gmra.mxu0 %v85
    %v240 = vpop.f32.mrf.mxu0
    %v241 = vadd.f32 0.0, %v240
    %242 = vmatmul.f32.gmra.mxu0 %v87
    %v243 = vpop.f32.mrf.mxu0
    %v244 = vadd.f32 0.0, %v243
    %245 = vdwg.mxu0
    %246 = vmatpush.msra.mxu0 %v213
    %247 = vmatpush.msra.mxu0 %v209
    %248 = vmatpush.msra.mxu0 %v205
    %249 = vmatpush.msra.mxu0 %v201
    %250 = vmatpush.msra.mxu0 %v197
    %251 = vmatpush.msra.mxu0 %v193
    %252 = vmatpush.msra.mxu0 %v189
    %253 = vmatpush.msra.mxu0 %v185
    %254 = vmatpush.msra.mxu0 %v181
    %255 = vmatpush.msra.mxu0 %v177
    %256 = vmatpush.msra.mxu0 %v173
    %257 = vmatpush.msra.mxu0 %v169
    %258 = vmatpush.msra.mxu0 %v165
    %259 = vmatpush.msra.mxu0 %v161
    %260 = vmatpush.msra.mxu0 %v157
    %261 = vmatpush.msra.mxu0 %v153
    %262 = vmatmul.f32.gmra.mxu0 %v82
    %v263 = vpop.f32.mrf.mxu0
    %v264 = vadd.f32 %v235, %v263
    %265 = vmatmul.f32.gmra.mxu0 %v84
    %v266 = vpop.f32.mrf.mxu0
    %v267 = vadd.f32 %v238, %v266
    %268 = vmatmul.f32.gmra.mxu0 %v86
    %v269 = vpop.f32.mrf.mxu0
    %v270 = vadd.f32 %v241, %v269
    %271 = vmatmul.f32.gmra.mxu0 %v88
    %v272 = vpop.f32.mrf.mxu0
    %v273 = vadd.f32 %v244, %v272
    %274 = vdwg.mxu0
    %275 = vmatpush.msra.mxu0 %v150
    %276 = vmatpush.msra.mxu0 %v146
    %277 = vmatpush.msra.mxu0 %v142
    %278 = vmatpush.msra.mxu0 %v138
    %279 = vmatpush.msra.mxu0 %v134
    %280 = vmatpush.msra.mxu0 %v130
    %281 = vmatpush.msra.mxu0 %v126
    %282 = vmatpush.msra.mxu0 %v122
    %283 = vmatpush.msra.mxu0 %v118
    %284 = vmatpush.msra.mxu0 %v114
    %285 = vmatpush.msra.mxu0 %v110
    %286 = vmatpush.msra.mxu0 %v106
    %287 = vmatpush.msra.mxu0 %v102
    %288 = vmatpush.msra.mxu0 %v98
    %289 = vmatpush.msra.mxu0 %v94
    %290 = vmatpush.msra.mxu0 %v90
    %291 = vmatmul.f32.gmra.mxu0 %v81
    %v292 = vpop.f32.mrf.mxu0
    %v293 = vadd.f32 0.0, %v292
    %294 = vmatmul.f32.gmra.mxu0 %v83
    %v295 = vpop.f32.mrf.mxu0
    %v296 = vadd.f32 0.0, %v295
    %297 = vmatmul.f32.gmra.mxu0 %v85
    %v298 = vpop.f32.mrf.mxu0
    %v299 = vadd.f32 0.0, %v298
    %300 = vmatmul.f32.gmra.mxu0 %v87
    %v301 = vpop.f32.mrf.mxu0
    %v302 = vadd.f32 0.0, %v301
    %303 = vdwg.mxu0
    %304 = vmatpush.msra.mxu0 %v214
    %305 = vmatpush.msra.mxu0 %v210
    %306 = vmatpush.msra.mxu0 %v206
    %307 = vmatpush.msra.mxu0 %v202
    %308 = vmatpush.msra.mxu0 %v198
    %309 = vmatpush.msra.mxu0 %v194
    %310 = vmatpush.msra.mxu0 %v190
    %311 = vmatpush.msra.mxu0 %v186
    %312 = vmatpush.msra.mxu0 %v182
    %313 = vmatpush.msra.mxu0 %v178
    %314 = vmatpush.msra.mxu0 %v174
    %315 = vmatpush.msra.mxu0 %v170
    %316 = vmatpush.msra.mxu0 %v166
    %317 = vmatpush.msra.mxu0 %v162
    %318 = vmatpush.msra.mxu0 %v158
    %319 = vmatpush.msra.mxu0 %v154
    %320 = vmatmul.f32.gmra.mxu0 %v82
    %v321 = vpop.f32.mrf.mxu0
    %v322 = vadd.f32 %v293, %v321
    %323 = vmatmul.f32.gmra.mxu0 %v84
    %v324 = vpop.f32.mrf.mxu0
    %v325 = vadd.f32 %v296, %v324
    %326 = vmatmul.f32.gmra.mxu0 %v86
    %v327 = vpop.f32.mrf.mxu0
    %v328 = vadd.f32 %v299, %v327
    %329 = vmatmul.f32.gmra.mxu0 %v88
    %v330 = vpop.f32.mrf.mxu0
    %v331 = vadd.f32 %v302, %v330
    %332 = vdwg.mxu0
    %333 = vmatpush.msra.mxu0 %v151
    %334 = vmatpush.msra.mxu0 %v147
    %335 = vmatpush.msra.mxu0 %v143
    %336 = vmatpush.msra.mxu0 %v139
    %337 = vmatpush.msra.mxu0 %v135
    %338 = vmatpush.msra.mxu0 %v131
    %339 = vmatpush.msra.mxu0 %v127
    %340 = vmatpush.msra.mxu0 %v123
    %341 = vmatpush.msra.mxu0 %v119
    %342 = vmatpush.msra.mxu0 %v115
    %343 = vmatpush.msra.mxu0 %v111
    %344 = vmatpush.msra.mxu0 %v107
    %345 = vmatpush.msra.mxu0 %v103
    %346 = vmatpush.msra.mxu0 %v99
    %347 = vmatpush.msra.mxu0 %v95
    %348 = vmatpush.msra.mxu0 %v91
    %349 = vmatmul.f32.gmra.mxu0 %v81
    %v350 = vpop.f32.mrf.mxu0
    %v351 = vadd.f32 0.0, %v350
    %352 = vmatmul.f32.gmra.mxu0 %v83
    %v353 = vpop.f32.mrf.mxu0
    %v354 = vadd.f32 0.0, %v353
    %355 = vmatmul.f32.gmra.mxu0 %v85
    %v356 = vpop.f32.mrf.mxu0
    %v357 = vadd.f32 0.0, %v356
    %358 = vmatmul.f32.gmra.mxu0 %v87
    %v359 = vpop.f32.mrf.mxu0
    %v360 = vadd.f32 0.0, %v359
    %361 = vdwg.mxu0
    %362 = vmatpush.msra.mxu0 %v215
    %363 = vmatpush.msra.mxu0 %v211
    %364 = vmatpush.msra.mxu0 %v207
    %365 = vmatpush.msra.mxu0 %v203
    %366 = vmatpush.msra.mxu0 %v199
    %367 = vmatpush.msra.mxu0 %v195
    %368 = vmatpush.msra.mxu0 %v191
    %369 = vmatpush.msra.mxu0 %v187
    %370 = vmatpush.msra.mxu0 %v183
    %371 = vmatpush.msra.mxu0 %v179
    %372 = vmatpush.msra.mxu0 %v175
    %373 = vmatpush.msra.mxu0 %v171
    %374 = vmatpush.msra.mxu0 %v167
    %375 = vmatpush.msra.mxu0 %v163
    %376 = vmatpush.msra.mxu0 %v159
    %377 = vmatpush.msra.mxu0 %v155
    %378 = vmatmul.f32.gmra.mxu0 %v82
    %v379 = vpop.f32.mrf.mxu0
    %v380 = vadd.f32 %v351, %v379
    %381 = vmatmul.f32.gmra.mxu0 %v84
    %v382 = vpop.f32.mrf.mxu0
    %v383 = vadd.f32 %v354, %v382
    %384 = vmatmul.f32.gmra.mxu0 %v86
    %v385 = vpop.f32.mrf.mxu0
    %v386 = vadd.f32 %v357, %v385
    %387 = vmatmul.f32.gmra.mxu0 %v88
    %v388 = vpop.f32.mrf.mxu0
    %v389 = vadd.f32 %v360, %v388
    %390 = vdwg.mxu0
    %391 = vmatpush.msra.mxu0 %v152
    %392 = vmatpush.msra.mxu0 %v148
    %393 = vmatpush.msra.mxu0 %v144
    %394 = vmatpush.msra.mxu0 %v140
    %395 = vmatpush.msra.mxu0 %v136
    %396 = vmatpush.msra.mxu0 %v132
    %397 = vmatpush.msra.mxu0 %v128
    %398 = vmatpush.msra.mxu0 %v124
    %399 = vmatpush.msra.mxu0 %v120
    %400 = vmatpush.msra.mxu0 %v116
    %401 = vmatpush.msra.mxu0 %v112
    %402 = vmatpush.msra.mxu0 %v108
    %403 = vmatpush.msra.mxu0 %v104
    %404 = vmatpush.msra.mxu0 %v100
    %405 = vmatpush.msra.mxu0 %v96
    %406 = vmatpush.msra.mxu0 %v92
    %407 = vmatmul.f32.gmra.mxu0 %v81
    %v408 = vpop.f32.mrf.mxu0
    %v409 = vadd.f32 0.0, %v408
    %410 = vmatmul.f32.gmra.mxu0 %v83
    %v411 = vpop.f32.mrf.mxu0
    %v412 = vadd.f32 0.0, %v411
    %413 = vmatmul.f32.gmra.mxu0 %v85
    %v414 = vpop.f32.mrf.mxu0
    %v415 = vadd.f32 0.0, %v414
    %416 = vmatmul.f32.gmra.mxu0 %v87
    %v417 = vpop.f32.mrf.mxu0
    %v418 = vadd.f32 0.0, %v417
    %419 = vdwg.mxu0
    %420 = vmatpush.msra.mxu0 %v216
    %421 = vmatpush.msra.mxu0 %v212
    %422 = vmatpush.msra.mxu0 %v208
    %423 = vmatpush.msra.mxu0 %v204
    %424 = vmatpush.msra.mxu0 %v200
    %425 = vmatpush.msra.mxu0 %v196
    %426 = vmatpush.msra.mxu0 %v192
    %427 = vmatpush.msra.mxu0 %v188
    %428 = vmatpush.msra.mxu0 %v184
    %429 = vmatpush.msra.mxu0 %v180
    %430 = vmatpush.msra.mxu0 %v176
    %431 = vmatpush.msra.mxu0 %v172
    %432 = vmatpush.msra.mxu0 %v168
    %433 = vmatpush.msra.mxu0 %v164
    %434 = vmatpush.msra.mxu0 %v160
    %435 = vmatpush.msra.mxu0 %v156
    %436 = vmatmul.f32.gmra.mxu0 %v82
    %v437 = vpop.f32.mrf.mxu0
    %v438 = vadd.f32 %v409, %v437
    %439 = vmatmul.f32.gmra.mxu0 %v84
    %v440 = vpop.f32.mrf.mxu0
    %v441 = vadd.f32 %v412, %v440
    %442 = vmatmul.f32.gmra.mxu0 %v86
    %v443 = vpop.f32.mrf.mxu0
    %v444 = vadd.f32 %v415, %v443
    %445 = vmatmul.f32.gmra.mxu0 %v88
    %v446 = vpop.f32.mrf.mxu0
    %v447 = vadd.f32 %v418, %v446
    %448 = vdwg.mxu0
    %v449 = vxor.u32 %v264, 2147483648
    %v450 = vxor.u32 %v322, 2147483648
    %v451 = vxor.u32 %v380, 2147483648
    %v452 = vxor.u32 %v438, 2147483648
    %v453 = vxor.u32 %v267, 2147483648
    %v454 = vxor.u32 %v325, 2147483648
    %v455 = vxor.u32 %v383, 2147483648
    %v456 = vxor.u32 %v441, 2147483648
    %v457 = vxor.u32 %v270, 2147483648
    %v458 = vxor.u32 %v328, 2147483648
    %v459 = vxor.u32 %v386, 2147483648
    %v460 = vxor.u32 %v444, 2147483648
    %v461 = vxor.u32 %v273, 2147483648
    %v462 = vxor.u32 %v331, 2147483648
    %v463 = vxor.u32 %v389, 2147483648
    %v464 = vxor.u32 %v447, 2147483648
    %v465 = vmul.f32 %v449, 1.442695
    %v466 = vpow.pop %v465
    %v467 = vmul.f32 %v450, 1.442695
    %v468 = vpow.pop %v467
    %v469 = vmul.f32 %v451, 1.442695
    %v470 = vpow.pop %v469
    %v471 = vmul.f32 %v452, 1.442695
    %v472 = vpow.pop %v471
    %v473 = vmul.f32 %v453, 1.442695
    %v474 = vpow.pop %v473
    %v475 = vmul.f32 %v454, 1.442695
    %v476 = vpow.pop %v475
    %v477 = vmul.f32 %v455, 1.442695
    %v478 = vpow.pop %v477
    %v479 = vmul.f32 %v456, 1.442695
    %v480 = vpow.pop %v479
    %v481 = vmul.f32 %v457, 1.442695
    %v482 = vpow.pop %v481
    %v483 = vmul.f32 %v458, 1.442695
    %v484 = vpow.pop %v483
    %v485 = vmul.f32 %v459, 1.442695
    %v486 = vpow.pop %v485
    %v487 = vmul.f32 %v460, 1.442695
    %v488 = vpow.pop %v487
    %v489 = vmul.f32 %v461, 1.442695
    %v490 = vpow.pop %v489
    %v491 = vmul.f32 %v462, 1.442695
    %v492 = vpow.pop %v491
    %v493 = vmul.f32 %v463, 1.442695
    %v494 = vpow.pop %v493
    %v495 = vmul.f32 %v464, 1.442695
    %v496 = vpow.pop %v495
    %v497 = vadd.f32 %v466, 1.0
    %v498 = vadd.f32 %v468, 1.0
    %v499 = vadd.f32 %v470, 1.0
    %v500 = vadd.f32 %v472, 1.0
    %v501 = vadd.f32 %v474, 1.0
    %v502 = vadd.f32 %v476, 1.0
    %v503 = vadd.f32 %v478, 1.0
    %v504 = vadd.f32 %v480, 1.0
    %v505 = vadd.f32 %v482, 1.0
    %v506 = vadd.f32 %v484, 1.0
    %v507 = vadd.f32 %v486, 1.0
    %v508 = vadd.f32 %v488, 1.0
    %v509 = vadd.f32 %v490, 1.0
    %v510 = vadd.f32 %v492, 1.0
    %v511 = vadd.f32 %v494, 1.0
    %v512 = vadd.f32 %v496, 1.0
    %v513 = vrcp.pop %v497
    %v514 = vmul.f32 %v497, %v513
    %v515 = vsub.f32 1.0, %v514
    %v516 = vmul.f32 %v513, %v515
    %v517 = vadd.f32 %v513, %v516
    %vm518 = vweird.f32 %v497
    %vm519 = vweird.f32 %v513
    %vm520 = vmor %vm518, %vm519
    %v521 = vsel %vm520, %v513, %v517
    %v522 = vand.u32 2147483647, %v497
    %vm523 = vcmp.eq.f32.partialorder %v522, 8.507059e+37
    %v524 = vand.u32 %v497, 2147483648
    %v525 = vor.u32 1.1754944e-38, %v524
    %v526 = vsel %vm523, %v525, %v521
    %v527 = vmul.f32 1.0, %v526
    %v528 = vrcp.pop %v498
    %v529 = vmul.f32 %v498, %v528
    %v530 = vsub.f32 1.0, %v529
    %v531 = vmul.f32 %v528, %v530
    %v532 = vadd.f32 %v528, %v531
    %vm533 = vweird.f32 %v498
    %vm534 = vweird.f32 %v528
    %vm535 = vmor %vm533, %vm534
    %v536 = vsel %vm535, %v528, %v532
    %v537 = vand.u32 2147483647, %v498
    %vm538 = vcmp.eq.f32.partialorder %v537, 8.507059e+37
    %v539 = vand.u32 %v498, 2147483648
    %v540 = vor.u32 1.1754944e-38, %v539
    %v541 = vsel %vm538, %v540, %v536
    %v542 = vmul.f32 1.0, %v541
    %v543 = vrcp.pop %v499
    %v544 = vmul.f32 %v499, %v543
    %v545 = vsub.f32 1.0, %v544
    %v546 = vmul.f32 %v543, %v545
    %v547 = vadd.f32 %v543, %v546
    %vm548 = vweird.f32 %v499
    %vm549 = vweird.f32 %v543
    %vm550 = vmor %vm548, %vm549
    %v551 = vsel %vm550, %v543, %v547
    %v552 = vand.u32 2147483647, %v499
    %vm553 = vcmp.eq.f32.partialorder %v552, 8.507059e+37
    %v554 = vand.u32 %v499, 2147483648
    %v555 = vor.u32 1.1754944e-38, %v554
    %v556 = vsel %vm553, %v555, %v551
    %v557 = vmul.f32 1.0, %v556
    %v558 = vrcp.pop %v500
    %v559 = vmul.f32 %v500, %v558
    %v560 = vsub.f32 1.0, %v559
    %v561 = vmul.f32 %v558, %v560
    %v562 = vadd.f32 %v558, %v561
    %vm563 = vweird.f32 %v500
    %vm564 = vweird.f32 %v558
    %vm565 = vmor %vm563, %vm564
    %v566 = vsel %vm565, %v558, %v562
    %v567 = vand.u32 2147483647, %v500
    %vm568 = vcmp.eq.f32.partialorder %v567, 8.507059e+37
    %v569 = vand.u32 %v500, 2147483648
    %v570 = vor.u32 1.1754944e-38, %v569
    %v571 = vsel %vm568, %v570, %v566
    %v572 = vmul.f32 1.0, %v571
    %v573 = vrcp.pop %v501
    %v574 = vmul.f32 %v501, %v573
    %v575 = vsub.f32 1.0, %v574
    %v576 = vmul.f32 %v573, %v575
    %v577 = vadd.f32 %v573, %v576
    %vm578 = vweird.f32 %v501
    %vm579 = vweird.f32 %v573
    %vm580 = vmor %vm578, %vm579
    %v581 = vsel %vm580, %v573, %v577
    %v582 = vand.u32 2147483647, %v501
    %vm583 = vcmp.eq.f32.partialorder %v582, 8.507059e+37
    %v584 = vand.u32 %v501, 2147483648
    %v585 = vor.u32 1.1754944e-38, %v584
    %v586 = vsel %vm583, %v585, %v581
    %v587 = vmul.f32 1.0, %v586
    %v588 = vrcp.pop %v502
    %v589 = vmul.f32 %v502, %v588
    %v590 = vsub.f32 1.0, %v589
    %v591 = vmul.f32 %v588, %v590
    %v592 = vadd.f32 %v588, %v591
    %vm593 = vweird.f32 %v502
    %vm594 = vweird.f32 %v588
    %vm595 = vmor %vm593, %vm594
    %v596 = vsel %vm595, %v588, %v592
    %v597 = vand.u32 2147483647, %v502
    %vm598 = vcmp.eq.f32.partialorder %v597, 8.507059e+37
    %v599 = vand.u32 %v502, 2147483648
    %v600 = vor.u32 1.1754944e-38, %v599
    %v601 = vsel %vm598, %v600, %v596
    %v602 = vmul.f32 1.0, %v601
    %v603 = vrcp.pop %v503
    %v604 = vmul.f32 %v503, %v603
    %v605 = vsub.f32 1.0, %v604
    %v606 = vmul.f32 %v603, %v605
    %v607 = vadd.f32 %v603, %v606
    %vm608 = vweird.f32 %v503
    %vm609 = vweird.f32 %v603
    %vm610 = vmor %vm608, %vm609
    %v611 = vsel %vm610, %v603, %v607
    %v612 = vand.u32 2147483647, %v503
    %vm613 = vcmp.eq.f32.partialorder %v612, 8.507059e+37
    %v614 = vand.u32 %v503, 2147483648
    %v615 = vor.u32 1.1754944e-38, %v614
    %v616 = vsel %vm613, %v615, %v611
    %v617 = vmul.f32 1.0, %v616
    %v618 = vrcp.pop %v504
    %v619 = vmul.f32 %v504, %v618
    %v620 = vsub.f32 1.0, %v619
    %v621 = vmul.f32 %v618, %v620
    %v622 = vadd.f32 %v618, %v621
    %vm623 = vweird.f32 %v504
    %vm624 = vweird.f32 %v618
    %vm625 = vmor %vm623, %vm624
    %v626 = vsel %vm625, %v618, %v622
    %v627 = vand.u32 2147483647, %v504
    %vm628 = vcmp.eq.f32.partialorder %v627, 8.507059e+37
    %v629 = vand.u32 %v504, 2147483648
    %v630 = vor.u32 1.1754944e-38, %v629
    %v631 = vsel %vm628, %v630, %v626
    %v632 = vmul.f32 1.0, %v631
    %v633 = vrcp.pop %v505
    %v634 = vmul.f32 %v505, %v633
    %v635 = vsub.f32 1.0, %v634
    %v636 = vmul.f32 %v633, %v635
    %v637 = vadd.f32 %v633, %v636
    %vm638 = vweird.f32 %v505
    %vm639 = vweird.f32 %v633
    %vm640 = vmor %vm638, %vm639
    %v641 = vsel %vm640, %v633, %v637
    %v642 = vand.u32 2147483647, %v505
    %vm643 = vcmp.eq.f32.partialorder %v642, 8.507059e+37
    %v644 = vand.u32 %v505, 2147483648
    %v645 = vor.u32 1.1754944e-38, %v644
    %v646 = vsel %vm643, %v645, %v641
    %v647 = vmul.f32 1.0, %v646
    %v648 = vrcp.pop %v506
    %v649 = vmul.f32 %v506, %v648
    %v650 = vsub.f32 1.0, %v649
    %v651 = vmul.f32 %v648, %v650
    %v652 = vadd.f32 %v648, %v651
    %vm653 = vweird.f32 %v506
    %vm654 = vweird.f32 %v648
    %vm655 = vmor %vm653, %vm654
    %v656 = vsel %vm655, %v648, %v652
    %v657 = vand.u32 2147483647, %v506
    %vm658 = vcmp.eq.f32.partialorder %v657, 8.507059e+37
    %v659 = vand.u32 %v506, 2147483648
    %v660 = vor.u32 1.1754944e-38, %v659
    %v661 = vsel %vm658, %v660, %v656
    %v662 = vmul.f32 1.0, %v661
    %v663 = vrcp.pop %v507
    %v664 = vmul.f32 %v507, %v663
    %v665 = vsub.f32 1.0, %v664
    %v666 = vmul.f32 %v663, %v665
    %v667 = vadd.f32 %v663, %v666
    %vm668 = vweird.f32 %v507
    %vm669 = vweird.f32 %v663
    %vm670 = vmor %vm668, %vm669
    %v671 = vsel %vm670, %v663, %v667
    %v672 = vand.u32 2147483647, %v507
    %vm673 = vcmp.eq.f32.partialorder %v672, 8.507059e+37
    %v674 = vand.u32 %v507, 2147483648
    %v675 = vor.u32 1.1754944e-38, %v674
    %v676 = vsel %vm673, %v675, %v671
    %v677 = vmul.f32 1.0, %v676
    %v678 = vrcp.pop %v508
    %v679 = vmul.f32 %v508, %v678
    %v680 = vsub.f32 1.0, %v679
    %v681 = vmul.f32 %v678, %v680
    %v682 = vadd.f32 %v678, %v681
    %vm683 = vweird.f32 %v508
    %vm684 = vweird.f32 %v678
    %vm685 = vmor %vm683, %vm684
    %v686 = vsel %vm685, %v678, %v682
    %v687 = vand.u32 2147483647, %v508
    %vm688 = vcmp.eq.f32.partialorder %v687, 8.507059e+37
    %v689 = vand.u32 %v508, 2147483648
    %v690 = vor.u32 1.1754944e-38, %v689
    %v691 = vsel %vm688, %v690, %v686
    %v692 = vmul.f32 1.0, %v691
    %v693 = vrcp.pop %v509
    %v694 = vmul.f32 %v509, %v693
    %v695 = vsub.f32 1.0, %v694
    %v696 = vmul.f32 %v693, %v695
    %v697 = vadd.f32 %v693, %v696
    %vm698 = vweird.f32 %v509
    %vm699 = vweird.f32 %v693
    %vm700 = vmor %vm698, %vm699
    %v701 = vsel %vm700, %v693, %v697
    %v702 = vand.u32 2147483647, %v509
    %vm703 = vcmp.eq.f32.partialorder %v702, 8.507059e+37
    %v704 = vand.u32 %v509, 2147483648
    %v705 = vor.u32 1.1754944e-38, %v704
    %v706 = vsel %vm703, %v705, %v701
    %v707 = vmul.f32 1.0, %v706
    %v708 = vrcp.pop %v510
    %v709 = vmul.f32 %v510, %v708
    %v710 = vsub.f32 1.0, %v709
    %v711 = vmul.f32 %v708, %v710
    %v712 = vadd.f32 %v708, %v711
    %vm713 = vweird.f32 %v510
    %vm714 = vweird.f32 %v708
    %vm715 = vmor %vm713, %vm714
    %v716 = vsel %vm715, %v708, %v712
    %v717 = vand.u32 2147483647, %v510
    %vm718 = vcmp.eq.f32.partialorder %v717, 8.507059e+37
    %v719 = vand.u32 %v510, 2147483648
    %v720 = vor.u32 1.1754944e-38, %v719
    %v721 = vsel %vm718, %v720, %v716
    %v722 = vmul.f32 1.0, %v721
    %v723 = vrcp.pop %v511
    %v724 = vmul.f32 %v511, %v723
    %v725 = vsub.f32 1.0, %v724
    %v726 = vmul.f32 %v723, %v725
    %v727 = vadd.f32 %v723, %v726
    %vm728 = vweird.f32 %v511
    %vm729 = vweird.f32 %v723
    %vm730 = vmor %vm728, %vm729
    %v731 = vsel %vm730, %v723, %v727
    %v732 = vand.u32 2147483647, %v511
    %vm733 = vcmp.eq.f32.partialorder %v732, 8.507059e+37
    %v734 = vand.u32 %v511, 2147483648
    %v735 = vor.u32 1.1754944e-38, %v734
    %v736 = vsel %vm733, %v735, %v731
    %v737 = vmul.f32 1.0, %v736
    %v738 = vrcp.pop %v512
    %v739 = vmul.f32 %v512, %v738
    %v740 = vsub.f32 1.0, %v739
    %v741 = vmul.f32 %v738, %v740
    %v742 = vadd.f32 %v738, %v741
    %vm743 = vweird.f32 %v512
    %vm744 = vweird.f32 %v738
    %vm745 = vmor %vm743, %vm744
    %v746 = vsel %vm745, %v738, %v742
    %v747 = vand.u32 2147483647, %v512
    %vm748 = vcmp.eq.f32.partialorder %v747, 8.507059e+37
    %v749 = vand.u32 %v512, 2147483648
    %v750 = vor.u32 1.1754944e-38, %v749
    %v751 = vsel %vm748, %v750, %v746
    %v752 = vmul.f32 1.0, %v751
    %v753 = vmul.f32 %v264, %v527
    %v754 = vmul.f32 %v322, %v542
    %v755 = vmul.f32 %v380, %v557
    %v756 = vmul.f32 %v438, %v572
    %v757 = vmul.f32 %v267, %v587
    %v758 = vmul.f32 %v325, %v602
    %v759 = vmul.f32 %v383, %v617
    %v760 = vmul.f32 %v441, %v632
    %v761 = vmul.f32 %v270, %v647
    %v762 = vmul.f32 %v328, %v662
    %v763 = vmul.f32 %v386, %v677
    %v764 = vmul.f32 %v444, %v692
    %v765 = vmul.f32 %v273, %v707
    %v766 = vmul.f32 %v331, %v722
    %v767 = vmul.f32 %v389, %v737
    %v768 = vmul.f32 %v447, %v752
    %v769 = vld [vmem:[#allocation7] sm:$0xff]
    %v770 = vld [vmem:[#allocation7 + $0x8] sm:$0xff]
    %v771 = vld [vmem:[#allocation7 + $0x10] sm:$0xff]
    %v772 = vld [vmem:[#allocation7 + $0x18] sm:$0xff]
    %v773 = vld [vmem:[#allocation7 + $0x20] sm:$0xff]
    %v774 = vld [vmem:[#allocation7 + $0x28] sm:$0xff]
    %v775 = vld [vmem:[#allocation7 + $0x30] sm:$0xff]
    %v776 = vld [vmem:[#allocation7 + $0x38] sm:$0xff]
    %v777 = vld [vmem:[#allocation7 + $0x40] sm:$0xff]
    %v778 = vld [vmem:[#allocation7 + $0x48] sm:$0xff]
    %v779 = vld [vmem:[#allocation7 + $0x50] sm:$0xff]
    %v780 = vld [vmem:[#allocation7 + $0x58] sm:$0xff]
    %v781 = vld [vmem:[#allocation7 + $0x60] sm:$0xff]
    %v782 = vld [vmem:[#allocation7 + $0x68] sm:$0xff]
    %v783 = vld [vmem:[#allocation7 + $0x70] sm:$0xff]
    %v784 = vld [vmem:[#allocation7 + $0x78] sm:$0xff]
    %v785 = vld [vmem:[#allocation7 + $0x80] sm:$0xff]
    %v786 = vld [vmem:[#allocation7 + $0x88] sm:$0xff]
    %v787 = vld [vmem:[#allocation7 + $0x90] sm:$0xff]
    %v788 = vld [vmem:[#allocation7 + $0x98] sm:$0xff]
    %v789 = vld [vmem:[#allocation7 + $0xa0] sm:$0xff]
    %v790 = vld [vmem:[#allocation7 + $0xa8] sm:$0xff]
    %v791 = vld [vmem:[#allocation7 + $0xb0] sm:$0xff]
    %v792 = vld [vmem:[#allocation7 + $0xb8] sm:$0xff]
    %v793 = vld [vmem:[#allocation7 + $0xc0] sm:$0xff]
    %v794 = vld [vmem:[#allocation7 + $0xc8] sm:$0xff]
    %v795 = vld [vmem:[#allocation7 + $0xd0] sm:$0xff]
    %v796 = vld [vmem:[#allocation7 + $0xd8] sm:$0xff]
    %v797 = vld [vmem:[#allocation7 + $0xe0] sm:$0xff]
    %v798 = vld [vmem:[#allocation7 + $0xe8] sm:$0xff]
    %v799 = vld [vmem:[#allocation7 + $0xf0] sm:$0xff]
    %v800 = vld [vmem:[#allocation7 + $0xf8] sm:$0xff]
    %v801 = vld [vmem:[#allocation7 + $0x100] sm:$0xff]
    %v802 = vld [vmem:[#allocation7 + $0x108] sm:$0xff]
    %v803 = vld [vmem:[#allocation7 + $0x110] sm:$0xff]
    %v804 = vld [vmem:[#allocation7 + $0x118] sm:$0xff]
    %v805 = vld [vmem:[#allocation7 + $0x120] sm:$0xff]
    %v806 = vld [vmem:[#allocation7 + $0x128] sm:$0xff]
    %v807 = vld [vmem:[#allocation7 + $0x130] sm:$0xff]
    %v808 = vld [vmem:[#allocation7 + $0x138] sm:$0xff]
    %v809 = vld [vmem:[#allocation7 + $0x140] sm:$0xff]
    %v810 = vld [vmem:[#allocation7 + $0x148] sm:$0xff]
    %v811 = vld [vmem:[#allocation7 + $0x150] sm:$0xff]
    %v812 = vld [vmem:[#allocation7 + $0x158] sm:$0xff]
    %v813 = vld [vmem:[#allocation7 + $0x160] sm:$0xff]
    %v814 = vld [vmem:[#allocation7 + $0x168] sm:$0xff]
    %v815 = vld [vmem:[#allocation7 + $0x170] sm:$0xff]
    %v816 = vld [vmem:[#allocation7 + $0x178] sm:$0xff]
    %v817 = vld [vmem:[#allocation7 + $0x180] sm:$0xff]
    %v818 = vld [vmem:[#allocation7 + $0x188] sm:$0xff]
    %v819 = vld [vmem:[#allocation7 + $0x190] sm:$0xff]
    %v820 = vld [vmem:[#allocation7 + $0x198] sm:$0xff]
    %v821 = vld [vmem:[#allocation7 + $0x1a0] sm:$0xff]
    %v822 = vld [vmem:[#allocation7 + $0x1a8] sm:$0xff]
    %v823 = vld [vmem:[#allocation7 + $0x1b0] sm:$0xff]
    %v824 = vld [vmem:[#allocation7 + $0x1b8] sm:$0xff]
    %v825 = vld [vmem:[#allocation7 + $0x1c0] sm:$0xff]
    %v826 = vld [vmem:[#allocation7 + $0x1c8] sm:$0xff]
    %v827 = vld [vmem:[#allocation7 + $0x1d0] sm:$0xff]
    %v828 = vld [vmem:[#allocation7 + $0x1d8] sm:$0xff]
    %v829 = vld [vmem:[#allocation7 + $0x1e0] sm:$0xff]
    %v830 = vld [vmem:[#allocation7 + $0x1e8] sm:$0xff]
    %v831 = vld [vmem:[#allocation7 + $0x1f0] sm:$0xff]
    %v832 = vld [vmem:[#allocation7 + $0x1f8] sm:$0xff]
    %v833 = vld [vmem:[#allocation7 + $0x200] sm:$0xff]
    %v834 = vld [vmem:[#allocation7 + $0x208] sm:$0xff]
    %v835 = vld [vmem:[#allocation7 + $0x210] sm:$0xff]
    %v836 = vld [vmem:[#allocation7 + $0x218] sm:$0xff]
    %v837 = vld [vmem:[#allocation7 + $0x220] sm:$0xff]
    %v838 = vld [vmem:[#allocation7 + $0x228] sm:$0xff]
    %v839 = vld [vmem:[#allocation7 + $0x230] sm:$0xff]
    %v840 = vld [vmem:[#allocation7 + $0x238] sm:$0xff]
    %v841 = vld [vmem:[#allocation7 + $0x240] sm:$0xff]
    %v842 = vld [vmem:[#allocation7 + $0x248] sm:$0xff]
    %v843 = vld [vmem:[#allocation7 + $0x250] sm:$0xff]
    %v844 = vld [vmem:[#allocation7 + $0x258] sm:$0xff]
    %v845 = vld [vmem:[#allocation7 + $0x260] sm:$0xff]
    %v846 = vld [vmem:[#allocation7 + $0x268] sm:$0xff]
    %v847 = vld [vmem:[#allocation7 + $0x270] sm:$0xff]
    %v848 = vld [vmem:[#allocation7 + $0x278] sm:$0xff]
    %v849 = vld [vmem:[#allocation7 + $0x280] sm:$0xff]
    %v850 = vld [vmem:[#allocation7 + $0x288] sm:$0xff]
    %v851 = vld [vmem:[#allocation7 + $0x290] sm:$0xff]
    %v852 = vld [vmem:[#allocation7 + $0x298] sm:$0xff]
    %v853 = vld [vmem:[#allocation7 + $0x2a0] sm:$0xff]
    %v854 = vld [vmem:[#allocation7 + $0x2a8] sm:$0xff]
    %v855 = vld [vmem:[#allocation7 + $0x2b0] sm:$0xff]
    %v856 = vld [vmem:[#allocation7 + $0x2b8] sm:$0xff]
    %v857 = vld [vmem:[#allocation7 + $0x2c0] sm:$0xff]
    %v858 = vld [vmem:[#allocation7 + $0x2c8] sm:$0xff]
    %v859 = vld [vmem:[#allocation7 + $0x2d0] sm:$0xff]
    %v860 = vld [vmem:[#allocation7 + $0x2d8] sm:$0xff]
    %v861 = vld [vmem:[#allocation7 + $0x2e0] sm:$0xff]
    %v862 = vld [vmem:[#allocation7 + $0x2e8] sm:$0xff]
    %v863 = vld [vmem:[#allocation7 + $0x2f0] sm:$0xff]
    %v864 = vld [vmem:[#allocation7 + $0x2f8] sm:$0xff]
    %v865 = vld [vmem:[#allocation7 + $0x300] sm:$0xff]
    %v866 = vld [vmem:[#allocation7 + $0x308] sm:$0xff]
    %v867 = vld [vmem:[#allocation7 + $0x310] sm:$0xff]
    %v868 = vld [vmem:[#allocation7 + $0x318] sm:$0xff]
    %v869 = vld [vmem:[#allocation7 + $0x320] sm:$0xff]
    %v870 = vld [vmem:[#allocation7 + $0x328] sm:$0xff]
    %v871 = vld [vmem:[#allocation7 + $0x330] sm:$0xff]
    %v872 = vld [vmem:[#allocation7 + $0x338] sm:$0xff]
    %v873 = vld [vmem:[#allocation7 + $0x340] sm:$0xff]
    %v874 = vld [vmem:[#allocation7 + $0x348] sm:$0xff]
    %v875 = vld [vmem:[#allocation7 + $0x350] sm:$0xff]
    %v876 = vld [vmem:[#allocation7 + $0x358] sm:$0xff]
    %v877 = vld [vmem:[#allocation7 + $0x360] sm:$0xff]
    %v878 = vld [vmem:[#allocation7 + $0x368] sm:$0xff]
    %v879 = vld [vmem:[#allocation7 + $0x370] sm:$0xff]
    %v880 = vld [vmem:[#allocation7 + $0x378] sm:$0xff]
    %v881 = vld [vmem:[#allocation7 + $0x380] sm:$0xff]
    %v882 = vld [vmem:[#allocation7 + $0x388] sm:$0xff]
    %v883 = vld [vmem:[#allocation7 + $0x390] sm:$0xff]
    %v884 = vld [vmem:[#allocation7 + $0x398] sm:$0xff]
    %v885 = vld [vmem:[#allocation7 + $0x3a0] sm:$0xff]
    %v886 = vld [vmem:[#allocation7 + $0x3a8] sm:$0xff]
    %v887 = vld [vmem:[#allocation7 + $0x3b0] sm:$0xff]
    %v888 = vld [vmem:[#allocation7 + $0x3b8] sm:$0xff]
    %v889 = vld [vmem:[#allocation7 + $0x3c0] sm:$0xff]
    %v890 = vld [vmem:[#allocation7 + $0x3c8] sm:$0xff]
    %v891 = vld [vmem:[#allocation7 + $0x3d0] sm:$0xff]
    %v892 = vld [vmem:[#allocation7 + $0x3d8] sm:$0xff]
    %v893 = vld [vmem:[#allocation7 + $0x3e0] sm:$0xff]
    %v894 = vld [vmem:[#allocation7 + $0x3e8] sm:$0xff]
    %v895 = vld [vmem:[#allocation7 + $0x3f0] sm:$0xff]
    %v896 = vld [vmem:[#allocation7 + $0x3f8] sm:$0xff]
    %v897 = vld [vmem:[#allocation7 + $0x400] sm:$0xff]
    %v898 = vld [vmem:[#allocation7 + $0x408] sm:$0xff]
    %v899 = vld [vmem:[#allocation7 + $0x410] sm:$0xff]
    %v900 = vld [vmem:[#allocation7 + $0x418] sm:$0xff]
    %v901 = vld [vmem:[#allocation7 + $0x420] sm:$0xff]
    %v902 = vld [vmem:[#allocation7 + $0x428] sm:$0xff]
    %v903 = vld [vmem:[#allocation7 + $0x430] sm:$0xff]
    %v904 = vld [vmem:[#allocation7 + $0x438] sm:$0xff]
    %v905 = vld [vmem:[#allocation7 + $0x440] sm:$0xff]
    %v906 = vld [vmem:[#allocation7 + $0x448] sm:$0xff]
    %v907 = vld [vmem:[#allocation7 + $0x450] sm:$0xff]
    %v908 = vld [vmem:[#allocation7 + $0x458] sm:$0xff]
    %v909 = vld [vmem:[#allocation7 + $0x460] sm:$0xff]
    %v910 = vld [vmem:[#allocation7 + $0x468] sm:$0xff]
    %v911 = vld [vmem:[#allocation7 + $0x470] sm:$0xff]
    %v912 = vld [vmem:[#allocation7 + $0x478] sm:$0xff]
    %v913 = vld [vmem:[#allocation7 + $0x480] sm:$0xff]
    %v914 = vld [vmem:[#allocation7 + $0x488] sm:$0xff]
    %v915 = vld [vmem:[#allocation7 + $0x490] sm:$0xff]
    %v916 = vld [vmem:[#allocation7 + $0x498] sm:$0xff]
    %v917 = vld [vmem:[#allocation7 + $0x4a0] sm:$0xff]
    %v918 = vld [vmem:[#allocation7 + $0x4a8] sm:$0xff]
    %v919 = vld [vmem:[#allocation7 + $0x4b0] sm:$0xff]
    %v920 = vld [vmem:[#allocation7 + $0x4b8] sm:$0xff]
    %v921 = vld [vmem:[#allocation7 + $0x4c0] sm:$0xff]
    %v922 = vld [vmem:[#allocation7 + $0x4c8] sm:$0xff]
    %v923 = vld [vmem:[#allocation7 + $0x4d0] sm:$0xff]
    %v924 = vld [vmem:[#allocation7 + $0x4d8] sm:$0xff]
    %v925 = vld [vmem:[#allocation7 + $0x4e0] sm:$0xff]
    %v926 = vld [vmem:[#allocation7 + $0x4e8] sm:$0xff]
    %v927 = vld [vmem:[#allocation7 + $0x4f0] sm:$0xff]
    %v928 = vld [vmem:[#allocation7 + $0x4f8] sm:$0xff]
    %v929 = vld [vmem:[#allocation7 + $0x500] sm:$0xff]
    %v930 = vld [vmem:[#allocation7 + $0x508] sm:$0xff]
    %v931 = vld [vmem:[#allocation7 + $0x510] sm:$0xff]
    %v932 = vld [vmem:[#allocation7 + $0x518] sm:$0xff]
    %v933 = vld [vmem:[#allocation7 + $0x520] sm:$0xff]
    %v934 = vld [vmem:[#allocation7 + $0x528] sm:$0xff]
    %v935 = vld [vmem:[#allocation7 + $0x530] sm:$0xff]
    %v936 = vld [vmem:[#allocation7 + $0x538] sm:$0xff]
    %v937 = vld [vmem:[#allocation7 + $0x540] sm:$0xff]
    %v938 = vld [vmem:[#allocation7 + $0x548] sm:$0xff]
    %v939 = vld [vmem:[#allocation7 + $0x550] sm:$0xff]
    %v940 = vld [vmem:[#allocation7 + $0x558] sm:$0xff]
    %v941 = vld [vmem:[#allocation7 + $0x560] sm:$0xff]
    %v942 = vld [vmem:[#allocation7 + $0x568] sm:$0xff]
    %v943 = vld [vmem:[#allocation7 + $0x570] sm:$0xff]
    %v944 = vld [vmem:[#allocation7 + $0x578] sm:$0xff]
    %v945 = vld [vmem:[#allocation7 + $0x580] sm:$0xff]
    %v946 = vld [vmem:[#allocation7 + $0x588] sm:$0xff]
    %v947 = vld [vmem:[#allocation7 + $0x590] sm:$0xff]
    %v948 = vld [vmem:[#allocation7 + $0x598] sm:$0xff]
    %v949 = vld [vmem:[#allocation7 + $0x5a0] sm:$0xff]
    %v950 = vld [vmem:[#allocation7 + $0x5a8] sm:$0xff]
    %v951 = vld [vmem:[#allocation7 + $0x5b0] sm:$0xff]
    %v952 = vld [vmem:[#allocation7 + $0x5b8] sm:$0xff]
    %v953 = vld [vmem:[#allocation7 + $0x5c0] sm:$0xff]
    %v954 = vld [vmem:[#allocation7 + $0x5c8] sm:$0xff]
    %v955 = vld [vmem:[#allocation7 + $0x5d0] sm:$0xff]
    %v956 = vld [vmem:[#allocation7 + $0x5d8] sm:$0xff]
    %v957 = vld [vmem:[#allocation7 + $0x5e0] sm:$0xff]
    %v958 = vld [vmem:[#allocation7 + $0x5e8] sm:$0xff]
    %v959 = vld [vmem:[#allocation7 + $0x5f0] sm:$0xff]
    %v960 = vld [vmem:[#allocation7 + $0x5f8] sm:$0xff]
    %v961 = vld [vmem:[#allocation7 + $0x600] sm:$0xff]
    %v962 = vld [vmem:[#allocation7 + $0x608] sm:$0xff]
    %v963 = vld [vmem:[#allocation7 + $0x610] sm:$0xff]
    %v964 = vld [vmem:[#allocation7 + $0x618] sm:$0xff]
    %v965 = vld [vmem:[#allocation7 + $0x620] sm:$0xff]
    %v966 = vld [vmem:[#allocation7 + $0x628] sm:$0xff]
    %v967 = vld [vmem:[#allocation7 + $0x630] sm:$0xff]
    %v968 = vld [vmem:[#allocation7 + $0x638] sm:$0xff]
    %v969 = vld [vmem:[#allocation7 + $0x640] sm:$0xff]
    %v970 = vld [vmem:[#allocation7 + $0x648] sm:$0xff]
    %v971 = vld [vmem:[#allocation7 + $0x650] sm:$0xff]
    %v972 = vld [vmem:[#allocation7 + $0x658] sm:$0xff]
    %v973 = vld [vmem:[#allocation7 + $0x660] sm:$0xff]
    %v974 = vld [vmem:[#allocation7 + $0x668] sm:$0xff]
    %v975 = vld [vmem:[#allocation7 + $0x670] sm:$0xff]
    %v976 = vld [vmem:[#allocation7 + $0x678] sm:$0xff]
    %v977 = vld [vmem:[#allocation7 + $0x680] sm:$0xff]
    %v978 = vld [vmem:[#allocation7 + $0x688] sm:$0xff]
    %v979 = vld [vmem:[#allocation7 + $0x690] sm:$0xff]
    %v980 = vld [vmem:[#allocation7 + $0x698] sm:$0xff]
    %v981 = vld [vmem:[#allocation7 + $0x6a0] sm:$0xff]
    %v982 = vld [vmem:[#allocation7 + $0x6a8] sm:$0xff]
    %v983 = vld [vmem:[#allocation7 + $0x6b0] sm:$0xff]
    %v984 = vld [vmem:[#allocation7 + $0x6b8] sm:$0xff]
    %v985 = vld [vmem:[#allocation7 + $0x6c0] sm:$0xff]
    %v986 = vld [vmem:[#allocation7 + $0x6c8] sm:$0xff]
    %v987 = vld [vmem:[#allocation7 + $0x6d0] sm:$0xff]
    %v988 = vld [vmem:[#allocation7 + $0x6d8] sm:$0xff]
    %v989 = vld [vmem:[#allocation7 + $0x6e0] sm:$0xff]
    %v990 = vld [vmem:[#allocation7 + $0x6e8] sm:$0xff]
    %v991 = vld [vmem:[#allocation7 + $0x6f0] sm:$0xff]
    %v992 = vld [vmem:[#allocation7 + $0x6f8] sm:$0xff]
    %v993 = vld [vmem:[#allocation7 + $0x700] sm:$0xff]
    %v994 = vld [vmem:[#allocation7 + $0x708] sm:$0xff]
    %v995 = vld [vmem:[#allocation7 + $0x710] sm:$0xff]
    %v996 = vld [vmem:[#allocation7 + $0x718] sm:$0xff]
    %v997 = vld [vmem:[#allocation7 + $0x720] sm:$0xff]
    %v998 = vld [vmem:[#allocation7 + $0x728] sm:$0xff]
    %v999 = vld [vmem:[#allocation7 + $0x730] sm:$0xff]
    %v1000 = vld [vmem:[#allocation7 + $0x738] sm:$0xff]
    %v1001 = vld [vmem:[#allocation7 + $0x740] sm:$0xff]
    %v1002 = vld [vmem:[#allocation7 + $0x748] sm:$0xff]
    %v1003 = vld [vmem:[#allocation7 + $0x750] sm:$0xff]
    %v1004 = vld [vmem:[#allocation7 + $0x758] sm:$0xff]
    %v1005 = vld [vmem:[#allocation7 + $0x760] sm:$0xff]
    %v1006 = vld [vmem:[#allocation7 + $0x768] sm:$0xff]
    %v1007 = vld [vmem:[#allocation7 + $0x770] sm:$0xff]
    %v1008 = vld [vmem:[#allocation7 + $0x778] sm:$0xff]
    %v1009 = vld [vmem:[#allocation7 + $0x780] sm:$0xff]
    %v1010 = vld [vmem:[#allocation7 + $0x788] sm:$0xff]
    %v1011 = vld [vmem:[#allocation7 + $0x790] sm:$0xff]
    %v1012 = vld [vmem:[#allocation7 + $0x798] sm:$0xff]
    %v1013 = vld [vmem:[#allocation7 + $0x7a0] sm:$0xff]
    %v1014 = vld [vmem:[#allocation7 + $0x7a8] sm:$0xff]
    %v1015 = vld [vmem:[#allocation7 + $0x7b0] sm:$0xff]
    %v1016 = vld [vmem:[#allocation7 + $0x7b8] sm:$0xff]
    %v1017 = vld [vmem:[#allocation7 + $0x7c0] sm:$0xff]
    %v1018 = vld [vmem:[#allocation7 + $0x7c8] sm:$0xff]
    %v1019 = vld [vmem:[#allocation7 + $0x7d0] sm:$0xff]
    %v1020 = vld [vmem:[#allocation7 + $0x7d8] sm:$0xff]
    %v1021 = vld [vmem:[#allocation7 + $0x7e0] sm:$0xff]
    %v1022 = vld [vmem:[#allocation7 + $0x7e8] sm:$0xff]
    %v1023 = vld [vmem:[#allocation7 + $0x7f0] sm:$0xff]
    %v1024 = vld [vmem:[#allocation7 + $0x7f8] sm:$0xff]
    %1025 = vmatpush.msra.mxu0 %v829
    %1026 = vmatpush.msra.mxu0 %v825
    %1027 = vmatpush.msra.mxu0 %v821
    %1028 = vmatpush.msra.mxu0 %v817
    %1029 = vmatpush.msra.mxu0 %v813
    %1030 = vmatpush.msra.mxu0 %v809
    %1031 = vmatpush.msra.mxu0 %v805
    %1032 = vmatpush.msra.mxu0 %v801
    %1033 = vmatpush.msra.mxu0 %v797
    %1034 = vmatpush.msra.mxu0 %v793
    %1035 = vmatpush.msra.mxu0 %v789
    %1036 = vmatpush.msra.mxu0 %v785
    %1037 = vmatpush.msra.mxu0 %v781
    %1038 = vmatpush.msra.mxu0 %v777
    %1039 = vmatpush.msra.mxu0 %v773
    %1040 = vmatpush.msra.mxu0 %v769
    %1041 = vmatmul.f32.gmra.mxu0 %v753
    %v1042 = vpop.f32.mrf.mxu0
    %v1043 = vadd.f32 0.0, %v1042
    %1044 = vmatmul.f32.gmra.mxu0 %v757
    %v1045 = vpop.f32.mrf.mxu0
    %v1046 = vadd.f32 0.0, %v1045
    %1047 = vmatmul.f32.gmra.mxu0 %v761
    %v1048 = vpop.f32.mrf.mxu0
    %v1049 = vadd.f32 0.0, %v1048
    %1050 = vmatmul.f32.gmra.mxu0 %v765
    %v1051 = vpop.f32.mrf.mxu0
    %v1052 = vadd.f32 0.0, %v1051
    %1053 = vdwg.mxu0
    %1054 = vmatpush.msra.mxu0 %v893
    %1055 = vmatpush.msra.mxu0 %v889
    %1056 = vmatpush.msra.mxu0 %v885
    %1057 = vmatpush.msra.mxu0 %v881
    %1058 = vmatpush.msra.mxu0 %v877
    %1059 = vmatpush.msra.mxu0 %v873
    %1060 = vmatpush.msra.mxu0 %v869
    %1061 = vmatpush.msra.mxu0 %v865
    %1062 = vmatpush.msra.mxu0 %v861
    %1063 = vmatpush.msra.mxu0 %v857
    %1064 = vmatpush.msra.mxu0 %v853
    %1065 = vmatpush.msra.mxu0 %v849
    %1066 = vmatpush.msra.mxu0 %v845
    %1067 = vmatpush.msra.mxu0 %v841
    %1068 = vmatpush.msra.mxu0 %v837
    %1069 = vmatpush.msra.mxu0 %v833
    %1070 = vmatmul.f32.gmra.mxu0 %v754
    %v1071 = vpop.f32.mrf.mxu0
    %v1072 = vadd.f32 %v1043, %v1071
    %1073 = vmatmul.f32.gmra.mxu0 %v758
    %v1074 = vpop.f32.mrf.mxu0
    %v1075 = vadd.f32 %v1046, %v1074
    %1076 = vmatmul.f32.gmra.mxu0 %v762
    %v1077 = vpop.f32.mrf.mxu0
    %v1078 = vadd.f32 %v1049, %v1077
    %1079 = vmatmul.f32.gmra.mxu0 %v766
    %v1080 = vpop.f32.mrf.mxu0
    %v1081 = vadd.f32 %v1052, %v1080
    %1082 = vdwg.mxu0
    %1083 = vmatpush.msra.mxu0 %v957
    %1084 = vmatpush.msra.mxu0 %v953
    %1085 = vmatpush.msra.mxu0 %v949
    %1086 = vmatpush.msra.mxu0 %v945
    %1087 = vmatpush.msra.mxu0 %v941
    %1088 = vmatpush.msra.mxu0 %v937
    %1089 = vmatpush.msra.mxu0 %v933
    %1090 = vmatpush.msra.mxu0 %v929
    %1091 = vmatpush.msra.mxu0 %v925
    %1092 = vmatpush.msra.mxu0 %v921
    %1093 = vmatpush.msra.mxu0 %v917
    %1094 = vmatpush.msra.mxu0 %v913
    %1095 = vmatpush.msra.mxu0 %v909
    %1096 = vmatpush.msra.mxu0 %v905
    %1097 = vmatpush.msra.mxu0 %v901
    %1098 = vmatpush.msra.mxu0 %v897
    %1099 = vmatmul.f32.gmra.mxu0 %v755
    %v1100 = vpop.f32.mrf.mxu0
    %v1101 = vadd.f32 %v1072, %v1100
    %1102 = vmatmul.f32.gmra.mxu0 %v759
    %v1103 = vpop.f32.mrf.mxu0
    %v1104 = vadd.f32 %v1075, %v1103
    %1105 = vmatmul.f32.gmra.mxu0 %v763
    %v1106 = vpop.f32.mrf.mxu0
    %v1107 = vadd.f32 %v1078, %v1106
    %1108 = vmatmul.f32.gmra.mxu0 %v767
    %v1109 = vpop.f32.mrf.mxu0
    %v1110 = vadd.f32 %v1081, %v1109
    %1111 = vdwg.mxu0
    %1112 = vmatpush.msra.mxu0 %v1021
    %1113 = vmatpush.msra.mxu0 %v1017
    %1114 = vmatpush.msra.mxu0 %v1013
    %1115 = vmatpush.msra.mxu0 %v1009
    %1116 = vmatpush.msra.mxu0 %v1005
    %1117 = vmatpush.msra.mxu0 %v1001
    %1118 = vmatpush.msra.mxu0 %v997
    %1119 = vmatpush.msra.mxu0 %v993
    %1120 = vmatpush.msra.mxu0 %v989
    %1121 = vmatpush.msra.mxu0 %v985
    %1122 = vmatpush.msra.mxu0 %v981
    %1123 = vmatpush.msra.mxu0 %v977
    %1124 = vmatpush.msra.mxu0 %v973
    %1125 = vmatpush.msra.mxu0 %v969
    %1126 = vmatpush.msra.mxu0 %v965
    %1127 = vmatpush.msra.mxu0 %v961
    %1128 = vmatmul.f32.gmra.mxu0 %v756
    %v1129 = vpop.f32.mrf.mxu0
    %v1130 = vadd.f32 %v1101, %v1129
    %1131 = vmatmul.f32.gmra.mxu0 %v760
    %v1132 = vpop.f32.mrf.mxu0
    %v1133 = vadd.f32 %v1104, %v1132
    %1134 = vmatmul.f32.gmra.mxu0 %v764
    %v1135 = vpop.f32.mrf.mxu0
    %v1136 = vadd.f32 %v1107, %v1135
    %1137 = vmatmul.f32.gmra.mxu0 %v768
    %v1138 = vpop.f32.mrf.mxu0
    %v1139 = vadd.f32 %v1110, %v1138
    %1140 = vdwg.mxu0
    %1141 = vmatpush.msra.mxu0 %v830
    %1142 = vmatpush.msra.mxu0 %v826
    %1143 = vmatpush.msra.mxu0 %v822
    %1144 = vmatpush.msra.mxu0 %v818
    %1145 = vmatpush.msra.mxu0 %v814
    %1146 = vmatpush.msra.mxu0 %v810
    %1147 = vmatpush.msra.mxu0 %v806
    %1148 = vmatpush.msra.mxu0 %v802
    %1149 = vmatpush.msra.mxu0 %v798
    %1150 = vmatpush.msra.mxu0 %v794
    %1151 = vmatpush.msra.mxu0 %v790
    %1152 = vmatpush.msra.mxu0 %v786
    %1153 = vmatpush.msra.mxu0 %v782
    %1154 = vmatpush.msra.mxu0 %v778
    %1155 = vmatpush.msra.mxu0 %v774
    %1156 = vmatpush.msra.mxu0 %v770
    %1157 = vmatmul.f32.gmra.mxu0 %v753
    %v1158 = vpop.f32.mrf.mxu0
    %v1159 = vadd.f32 0.0, %v1158
    %1160 = vmatmul.f32.gmra.mxu0 %v757
    %v1161 = vpop.f32.mrf.mxu0
    %v1162 = vadd.f32 0.0, %v1161
    %1163 = vmatmul.f32.gmra.mxu0 %v761
    %v1164 = vpop.f32.mrf.mxu0
    %v1165 = vadd.f32 0.0, %v1164
    %1166 = vmatmul.f32.gmra.mxu0 %v765
    %v1167 = vpop.f32.mrf.mxu0
    %v1168 = vadd.f32 0.0, %v1167
    %1169 = vdwg.mxu0
    %1170 = vmatpush.msra.mxu0 %v894
    %1171 = vmatpush.msra.mxu0 %v890
    %1172 = vmatpush.msra.mxu0 %v886
    %1173 = vmatpush.msra.mxu0 %v882
    %1174 = vmatpush.msra.mxu0 %v878
    %1175 = vmatpush.msra.mxu0 %v874
    %1176 = vmatpush.msra.mxu0 %v870
    %1177 = vmatpush.msra.mxu0 %v866
    %1178 = vmatpush.msra.mxu0 %v862
    %1179 = vmatpush.msra.mxu0 %v858
    %1180 = vmatpush.msra.mxu0 %v854
    %1181 = vmatpush.msra.mxu0 %v850
    %1182 = vmatpush.msra.mxu0 %v846
    %1183 = vmatpush.msra.mxu0 %v842
    %1184 = vmatpush.msra.mxu0 %v838
    %1185 = vmatpush.msra.mxu0 %v834
    %1186 = vmatmul.f32.gmra.mxu0 %v754
    %v1187 = vpop.f32.mrf.mxu0
    %v1188 = vadd.f32 %v1159, %v1187
    %1189 = vmatmul.f32.gmra.mxu0 %v758
    %v1190 = vpop.f32.mrf.mxu0
    %v1191 = vadd.f32 %v1162, %v1190
    %1192 = vmatmul.f32.gmra.mxu0 %v762
    %v1193 = vpop.f32.mrf.mxu0
    %v1194 = vadd.f32 %v1165, %v1193
    %1195 = vmatmul.f32.gmra.mxu0 %v766
    %v1196 = vpop.f32.mrf.mxu0
    %v1197 = vadd.f32 %v1168, %v1196
    %1198 = vdwg.mxu0
    %1199 = vmatpush.msra.mxu0 %v958
    %1200 = vmatpush.msra.mxu0 %v954
    %1201 = vmatpush.msra.mxu0 %v950
    %1202 = vmatpush.msra.mxu0 %v946
    %1203 = vmatpush.msra.mxu0 %v942
    %1204 = vmatpush.msra.mxu0 %v938
    %1205 = vmatpush.msra.mxu0 %v934
    %1206 = vmatpush.msra.mxu0 %v930
    %1207 = vmatpush.msra.mxu0 %v926
    %1208 = vmatpush.msra.mxu0 %v922
    %1209 = vmatpush.msra.mxu0 %v918
    %1210 = vmatpush.msra.mxu0 %v914
    %1211 = vmatpush.msra.mxu0 %v910
    %1212 = vmatpush.msra.mxu0 %v906
    %1213 = vmatpush.msra.mxu0 %v902
    %1214 = vmatpush.msra.mxu0 %v898
    %1215 = vmatmul.f32.gmra.mxu0 %v755
    %v1216 = vpop.f32.mrf.mxu0
    %v1217 = vadd.f32 %v1188, %v1216
    %1218 = vmatmul.f32.gmra.mxu0 %v759
    %v1219 = vpop.f32.mrf.mxu0
    %v1220 = vadd.f32 %v1191, %v1219
    %1221 = vmatmul.f32.gmra.mxu0 %v763
    %v1222 = vpop.f32.mrf.mxu0
    %v1223 = vadd.f32 %v1194, %v1222
    %1224 = vmatmul.f32.gmra.mxu0 %v767
    %v1225 = vpop.f32.mrf.mxu0
    %v1226 = vadd.f32 %v1197, %v1225
    %1227 = vdwg.mxu0
    %1228 = vmatpush.msra.mxu0 %v1022
    %1229 = vmatpush.msra.mxu0 %v1018
    %1230 = vmatpush.msra.mxu0 %v1014
    %1231 = vmatpush.msra.mxu0 %v1010
    %1232 = vmatpush.msra.mxu0 %v1006
    %1233 = vmatpush.msra.mxu0 %v1002
    %1234 = vmatpush.msra.mxu0 %v998
    %1235 = vmatpush.msra.mxu0 %v994
    %1236 = vmatpush.msra.mxu0 %v990
    %1237 = vmatpush.msra.mxu0 %v986
    %1238 = vmatpush.msra.mxu0 %v982
    %1239 = vmatpush.msra.mxu0 %v978
    %1240 = vmatpush.msra.mxu0 %v974
    %1241 = vmatpush.msra.mxu0 %v970
    %1242 = vmatpush.msra.mxu0 %v966
    %1243 = vmatpush.msra.mxu0 %v962
    %1244 = vmatmul.f32.gmra.mxu0 %v756
    %v1245 = vpop.f32.mrf.mxu0
    %v1246 = vadd.f32 %v1217, %v1245
    %1247 = vmatmul.f32.gmra.mxu0 %v760
    %v1248 = vpop.f32.mrf.mxu0
    %v1249 = vadd.f32 %v1220, %v1248
    %1250 = vmatmul.f32.gmra.mxu0 %v764
    %v1251 = vpop.f32.mrf.mxu0
    %v1252 = vadd.f32 %v1223, %v1251
    %1253 = vmatmul.f32.gmra.mxu0 %v768
    %v1254 = vpop.f32.mrf.mxu0
    %v1255 = vadd.f32 %v1226, %v1254
    %1256 = vdwg.mxu0
    %1257 = vmatpush.msra.mxu0 %v831
    %1258 = vmatpush.msra.mxu0 %v827
    %1259 = vmatpush.msra.mxu0 %v823
    %1260 = vmatpush.msra.mxu0 %v819
    %1261 = vmatpush.msra.mxu0 %v815
    %1262 = vmatpush.msra.mxu0 %v811
    %1263 = vmatpush.msra.mxu0 %v807
    %1264 = vmatpush.msra.mxu0 %v803
    %1265 = vmatpush.msra.mxu0 %v799
    %1266 = vmatpush.msra.mxu0 %v795
    %1267 = vmatpush.msra.mxu0 %v791
    %1268 = vmatpush.msra.mxu0 %v787
    %1269 = vmatpush.msra.mxu0 %v783
    %1270 = vmatpush.msra.mxu0 %v779
    %1271 = vmatpush.msra.mxu0 %v775
    %1272 = vmatpush.msra.mxu0 %v771
    %1273 = vmatmul.f32.gmra.mxu0 %v753
    %v1274 = vpop.f32.mrf.mxu0
    %v1275 = vadd.f32 0.0, %v1274
    %1276 = vmatmul.f32.gmra.mxu0 %v757
    %v1277 = vpop.f32.mrf.mxu0
    %v1278 = vadd.f32 0.0, %v1277
    %1279 = vmatmul.f32.gmra.mxu0 %v761
    %v1280 = vpop.f32.mrf.mxu0
    %v1281 = vadd.f32 0.0, %v1280
    %1282 = vmatmul.f32.gmra.mxu0 %v765
    %v1283 = vpop.f32.mrf.mxu0
    %v1284 = vadd.f32 0.0, %v1283
    %1285 = vdwg.mxu0
    %1286 = vmatpush.msra.mxu0 %v895
    %1287 = vmatpush.msra.mxu0 %v891
    %1288 = vmatpush.msra.mxu0 %v887
    %1289 = vmatpush.msra.mxu0 %v883
    %1290 = vmatpush.msra.mxu0 %v879
    %1291 = vmatpush.msra.mxu0 %v875
    %1292 = vmatpush.msra.mxu0 %v871
    %1293 = vmatpush.msra.mxu0 %v867
    %1294 = vmatpush.msra.mxu0 %v863
    %1295 = vmatpush.msra.mxu0 %v859
    %1296 = vmatpush.msra.mxu0 %v855
    %1297 = vmatpush.msra.mxu0 %v851
    %1298 = vmatpush.msra.mxu0 %v847
    %1299 = vmatpush.msra.mxu0 %v843
    %1300 = vmatpush.msra.mxu0 %v839
    %1301 = vmatpush.msra.mxu0 %v835
    %1302 = vmatmul.f32.gmra.mxu0 %v754
    %v1303 = vpop.f32.mrf.mxu0
    %v1304 = vadd.f32 %v1275, %v1303
    %1305 = vmatmul.f32.gmra.mxu0 %v758
    %v1306 = vpop.f32.mrf.mxu0
    %v1307 = vadd.f32 %v1278, %v1306
    %1308 = vmatmul.f32.gmra.mxu0 %v762
    %v1309 = vpop.f32.mrf.mxu0
    %v1310 = vadd.f32 %v1281, %v1309
    %1311 = vmatmul.f32.gmra.mxu0 %v766
    %v1312 = vpop.f32.mrf.mxu0
    %v1313 = vadd.f32 %v1284, %v1312
    %1314 = vdwg.mxu0
    %1315 = vmatpush.msra.mxu0 %v959
    %1316 = vmatpush.msra.mxu0 %v955
    %1317 = vmatpush.msra.mxu0 %v951
    %1318 = vmatpush.msra.mxu0 %v947
    %1319 = vmatpush.msra.mxu0 %v943
    %1320 = vmatpush.msra.mxu0 %v939
    %1321 = vmatpush.msra.mxu0 %v935
    %1322 = vmatpush.msra.mxu0 %v931
    %1323 = vmatpush.msra.mxu0 %v927
    %1324 = vmatpush.msra.mxu0 %v923
    %1325 = vmatpush.msra.mxu0 %v919
    %1326 = vmatpush.msra.mxu0 %v915
    %1327 = vmatpush.msra.mxu0 %v911
    %1328 = vmatpush.msra.mxu0 %v907
    %1329 = vmatpush.msra.mxu0 %v903
    %1330 = vmatpush.msra.mxu0 %v899
    %1331 = vmatmul.f32.gmra.mxu0 %v755
    %v1332 = vpop.f32.mrf.mxu0
    %v1333 = vadd.f32 %v1304, %v1332
    %1334 = vmatmul.f32.gmra.mxu0 %v759
    %v1335 = vpop.f32.mrf.mxu0
    %v1336 = vadd.f32 %v1307, %v1335
    %1337 = vmatmul.f32.gmra.mxu0 %v763
    %v1338 = vpop.f32.mrf.mxu0
    %v1339 = vadd.f32 %v1310, %v1338
    %1340 = vmatmul.f32.gmra.mxu0 %v767
    %v1341 = vpop.f32.mrf.mxu0
    %v1342 = vadd.f32 %v1313, %v1341
    %1343 = vdwg.mxu0
    %1344 = vmatpush.msra.mxu0 %v1023
    %1345 = vmatpush.msra.mxu0 %v1019
    %1346 = vmatpush.msra.mxu0 %v1015
    %1347 = vmatpush.msra.mxu0 %v1011
    %1348 = vmatpush.msra.mxu0 %v1007
    %1349 = vmatpush.msra.mxu0 %v1003
    %1350 = vmatpush.msra.mxu0 %v999
    %1351 = vmatpush.msra.mxu0 %v995
    %1352 = vmatpush.msra.mxu0 %v991
    %1353 = vmatpush.msra.mxu0 %v987
    %1354 = vmatpush.msra.mxu0 %v983
    %1355 = vmatpush.msra.mxu0 %v979
    %1356 = vmatpush.msra.mxu0 %v975
    %1357 = vmatpush.msra.mxu0 %v971
    %1358 = vmatpush.msra.mxu0 %v967
    %1359 = vmatpush.msra.mxu0 %v963
    %1360 = vmatmul.f32.gmra.mxu0 %v756
    %v1361 = vpop.f32.mrf.mxu0
    %v1362 = vadd.f32 %v1333, %v1361
    %1363 = vmatmul.f32.gmra.mxu0 %v760
    %v1364 = vpop.f32.mrf.mxu0
    %v1365 = vadd.f32 %v1336, %v1364
    %1366 = vmatmul.f32.gmra.mxu0 %v764
    %v1367 = vpop.f32.mrf.mxu0
    %v1368 = vadd.f32 %v1339, %v1367
    %1369 = vmatmul.f32.gmra.mxu0 %v768
    %v1370 = vpop.f32.mrf.mxu0
    %v1371 = vadd.f32 %v1342, %v1370
    %1372 = vdwg.mxu0
    %1373 = vmatpush.msra.mxu0 %v832
    %1374 = vmatpush.msra.mxu0 %v828
    %1375 = vmatpush.msra.mxu0 %v824
    %1376 = vmatpush.msra.mxu0 %v820
    %1377 = vmatpush.msra.mxu0 %v816
    %1378 = vmatpush.msra.mxu0 %v812
    %1379 = vmatpush.msra.mxu0 %v808
    %1380 = vmatpush.msra.mxu0 %v804
    %1381 = vmatpush.msra.mxu0 %v800
    %1382 = vmatpush.msra.mxu0 %v796
    %1383 = vmatpush.msra.mxu0 %v792
    %1384 = vmatpush.msra.mxu0 %v788
    %1385 = vmatpush.msra.mxu0 %v784
    %1386 = vmatpush.msra.mxu0 %v780
    %1387 = vmatpush.msra.mxu0 %v776
    %1388 = vmatpush.msra.mxu0 %v772
    %1389 = vmatmul.f32.gmra.mxu0 %v753
    %v1390 = vpop.f32.mrf.mxu0
    %v1391 = vadd.f32 0.0, %v1390
    %1392 = vmatmul.f32.gmra.mxu0 %v757
    %v1393 = vpop.f32.mrf.mxu0
    %v1394 = vadd.f32 0.0, %v1393
    %1395 = vmatmul.f32.gmra.mxu0 %v761
    %v1396 = vpop.f32.mrf.mxu0
    %v1397 = vadd.f32 0.0, %v1396
    %1398 = vmatmul.f32.gmra.mxu0 %v765
    %v1399 = vpop.f32.mrf.mxu0
    %v1400 = vadd.f32 0.0, %v1399
    %1401 = vdwg.mxu0
    %1402 = vmatpush.msra.mxu0 %v896
    %1403 = vmatpush.msra.mxu0 %v892
    %1404 = vmatpush.msra.mxu0 %v888
    %1405 = vmatpush.msra.mxu0 %v884
    %1406 = vmatpush.msra.mxu0 %v880
    %1407 = vmatpush.msra.mxu0 %v876
    %1408 = vmatpush.msra.mxu0 %v872
    %1409 = vmatpush.msra.mxu0 %v868
    %1410 = vmatpush.msra.mxu0 %v864
    %1411 = vmatpush.msra.mxu0 %v860
    %1412 = vmatpush.msra.mxu0 %v856
    %1413 = vmatpush.msra.mxu0 %v852
    %1414 = vmatpush.msra.mxu0 %v848
    %1415 = vmatpush.msra.mxu0 %v844
    %1416 = vmatpush.msra.mxu0 %v840
    %1417 = vmatpush.msra.mxu0 %v836
    %1418 = vmatmul.f32.gmra.mxu0 %v754
    %v1419 = vpop.f32.mrf.mxu0
    %v1420 = vadd.f32 %v1391, %v1419
    %1421 = vmatmul.f32.gmra.mxu0 %v758
    %v1422 = vpop.f32.mrf.mxu0
    %v1423 = vadd.f32 %v1394, %v1422
    %1424 = vmatmul.f32.gmra.mxu0 %v762
    %v1425 = vpop.f32.mrf.mxu0
    %v1426 = vadd.f32 %v1397, %v1425
    %1427 = vmatmul.f32.gmra.mxu0 %v766
    %v1428 = vpop.f32.mrf.mxu0
    %v1429 = vadd.f32 %v1400, %v1428
    %1430 = vdwg.mxu0
    %1431 = vmatpush.msra.mxu0 %v960
    %1432 = vmatpush.msra.mxu0 %v956
    %1433 = vmatpush.msra.mxu0 %v952
    %1434 = vmatpush.msra.mxu0 %v948
    %1435 = vmatpush.msra.mxu0 %v944
    %1436 = vmatpush.msra.mxu0 %v940
    %1437 = vmatpush.msra.mxu0 %v936
    %1438 = vmatpush.msra.mxu0 %v932
    %1439 = vmatpush.msra.mxu0 %v928
    %1440 = vmatpush.msra.mxu0 %v924
    %1441 = vmatpush.msra.mxu0 %v920
    %1442 = vmatpush.msra.mxu0 %v916
    %1443 = vmatpush.msra.mxu0 %v912
    %1444 = vmatpush.msra.mxu0 %v908
    %1445 = vmatpush.msra.mxu0 %v904
    %1446 = vmatpush.msra.mxu0 %v900
    %1447 = vmatmul.f32.gmra.mxu0 %v755
    %v1448 = vpop.f32.mrf.mxu0
    %v1449 = vadd.f32 %v1420, %v1448
    %1450 = vmatmul.f32.gmra.mxu0 %v759
    %v1451 = vpop.f32.mrf.mxu0
    %v1452 = vadd.f32 %v1423, %v1451
    %1453 = vmatmul.f32.gmra.mxu0 %v763
    %v1454 = vpop.f32.mrf.mxu0
    %v1455 = vadd.f32 %v1426, %v1454
    %1456 = vmatmul.f32.gmra.mxu0 %v767
    %v1457 = vpop.f32.mrf.mxu0
    %v1458 = vadd.f32 %v1429, %v1457
    %1459 = vdwg.mxu0
    %1460 = vmatpush.msra.mxu0 %v1024
    %1461 = vmatpush.msra.mxu0 %v1020
    %1462 = vmatpush.msra.mxu0 %v1016
    %1463 = vmatpush.msra.mxu0 %v1012
    %1464 = vmatpush.msra.mxu0 %v1008
    %1465 = vmatpush.msra.mxu0 %v1004
    %1466 = vmatpush.msra.mxu0 %v1000
    %1467 = vmatpush.msra.mxu0 %v996
    %1468 = vmatpush.msra.mxu0 %v992
    %1469 = vmatpush.msra.mxu0 %v988
    %1470 = vmatpush.msra.mxu0 %v984
    %1471 = vmatpush.msra.mxu0 %v980
    %1472 = vmatpush.msra.mxu0 %v976
    %1473 = vmatpush.msra.mxu0 %v972
    %1474 = vmatpush.msra.mxu0 %v968
    %1475 = vmatpush.msra.mxu0 %v964
    %1476 = vmatmul.f32.gmra.mxu0 %v756
    %v1477 = vpop.f32.mrf.mxu0
    %v1478 = vadd.f32 %v1449, %v1477
    %1479 = vmatmul.f32.gmra.mxu0 %v760
    %v1480 = vpop.f32.mrf.mxu0
    %v1481 = vadd.f32 %v1452, %v1480
    %1482 = vmatmul.f32.gmra.mxu0 %v764
    %v1483 = vpop.f32.mrf.mxu0
    %v1484 = vadd.f32 %v1455, %v1483
    %1485 = vmatmul.f32.gmra.mxu0 %v768
    %v1486 = vpop.f32.mrf.mxu0
    %v1487 = vadd.f32 %v1458, %v1486
    %1488 = vdwg.mxu0
    %v1489 = vxor.u32 %v1130, 2147483648
    %v1490 = vxor.u32 %v1246, 2147483648
    %v1491 = vxor.u32 %v1362, 2147483648
    %v1492 = vxor.u32 %v1478, 2147483648
    %v1493 = vxor.u32 %v1133, 2147483648
    %v1494 = vxor.u32 %v1249, 2147483648
    %v1495 = vxor.u32 %v1365, 2147483648
    %v1496 = vxor.u32 %v1481, 2147483648
    %v1497 = vxor.u32 %v1136, 2147483648
    %v1498 = vxor.u32 %v1252, 2147483648
    %v1499 = vxor.u32 %v1368, 2147483648
    %v1500 = vxor.u32 %v1484, 2147483648
    %v1501 = vxor.u32 %v1139, 2147483648
    %v1502 = vxor.u32 %v1255, 2147483648
    %v1503 = vxor.u32 %v1371, 2147483648
    %v1504 = vxor.u32 %v1487, 2147483648
    %v1505 = vmul.f32 %v1489, 1.442695
    %v1506 = vpow.pop %v1505
    %v1507 = vmul.f32 %v1490, 1.442695
    %v1508 = vpow.pop %v1507
    %v1509 = vmul.f32 %v1491, 1.442695
    %v1510 = vpow.pop %v1509
    %v1511 = vmul.f32 %v1492, 1.442695
    %v1512 = vpow.pop %v1511
    %v1513 = vmul.f32 %v1493, 1.442695
    %v1514 = vpow.pop %v1513
    %v1515 = vmul.f32 %v1494, 1.442695
    %v1516 = vpow.pop %v1515
    %v1517 = vmul.f32 %v1495, 1.442695
    %v1518 = vpow.pop %v1517
    %v1519 = vmul.f32 %v1496, 1.442695
    %v1520 = vpow.pop %v1519
    %v1521 = vmul.f32 %v1497, 1.442695
    %v1522 = vpow.pop %v1521
    %v1523 = vmul.f32 %v1498, 1.442695
    %v1524 = vpow.pop %v1523
    %v1525 = vmul.f32 %v1499, 1.442695
    %v1526 = vpow.pop %v1525
    %v1527 = vmul.f32 %v1500, 1.442695
    %v1528 = vpow.pop %v1527
    %v1529 = vmul.f32 %v1501, 1.442695
    %v1530 = vpow.pop %v1529
    %v1531 = vmul.f32 %v1502, 1.442695
    %v1532 = vpow.pop %v1531
    %v1533 = vmul.f32 %v1503, 1.442695
    %v1534 = vpow.pop %v1533
    %v1535 = vmul.f32 %v1504, 1.442695
    %v1536 = vpow.pop %v1535
    %v1537 = vadd.f32 %v1506, 1.0
    %v1538 = vadd.f32 %v1508, 1.0
    %v1539 = vadd.f32 %v1510, 1.0
    %v1540 = vadd.f32 %v1512, 1.0
    %v1541 = vadd.f32 %v1514, 1.0
    %v1542 = vadd.f32 %v1516, 1.0
    %v1543 = vadd.f32 %v1518, 1.0
    %v1544 = vadd.f32 %v1520, 1.0
    %v1545 = vadd.f32 %v1522, 1.0
    %v1546 = vadd.f32 %v1524, 1.0
    %v1547 = vadd.f32 %v1526, 1.0
    %v1548 = vadd.f32 %v1528, 1.0
    %v1549 = vadd.f32 %v1530, 1.0
    %v1550 = vadd.f32 %v1532, 1.0
    %v1551 = vadd.f32 %v1534, 1.0
    %v1552 = vadd.f32 %v1536, 1.0
    %v1553 = vrcp.pop %v1537
    %v1554 = vmul.f32 %v1537, %v1553
    %v1555 = vsub.f32 1.0, %v1554
    %v1556 = vmul.f32 %v1553, %v1555
    %v1557 = vadd.f32 %v1553, %v1556
    %vm1558 = vweird.f32 %v1537
    %vm1559 = vweird.f32 %v1553
    %vm1560 = vmor %vm1558, %vm1559
    %v1561 = vsel %vm1560, %v1553, %v1557
    %v1562 = vand.u32 2147483647, %v1537
    %vm1563 = vcmp.eq.f32.partialorder %v1562, 8.507059e+37
    %v1564 = vand.u32 %v1537, 2147483648
    %v1565 = vor.u32 1.1754944e-38, %v1564
    %v1566 = vsel %vm1563, %v1565, %v1561
    %v1567 = vmul.f32 1.0, %v1566
    %v1568 = vrcp.pop %v1538
    %v1569 = vmul.f32 %v1538, %v1568
    %v1570 = vsub.f32 1.0, %v1569
    %v1571 = vmul.f32 %v1568, %v1570
    %v1572 = vadd.f32 %v1568, %v1571
    %vm1573 = vweird.f32 %v1538
    %vm1574 = vweird.f32 %v1568
    %vm1575 = vmor %vm1573, %vm1574
    %v1576 = vsel %vm1575, %v1568, %v1572
    %v1577 = vand.u32 2147483647, %v1538
    %vm1578 = vcmp.eq.f32.partialorder %v1577, 8.507059e+37
    %v1579 = vand.u32 %v1538, 2147483648
    %v1580 = vor.u32 1.1754944e-38, %v1579
    %v1581 = vsel %vm1578, %v1580, %v1576
    %v1582 = vmul.f32 1.0, %v1581
    %v1583 = vrcp.pop %v1539
    %v1584 = vmul.f32 %v1539, %v1583
    %v1585 = vsub.f32 1.0, %v1584
    %v1586 = vmul.f32 %v1583, %v1585
    %v1587 = vadd.f32 %v1583, %v1586
    %vm1588 = vweird.f32 %v1539
    %vm1589 = vweird.f32 %v1583
    %vm1590 = vmor %vm1588, %vm1589
    %v1591 = vsel %vm1590, %v1583, %v1587
    %v1592 = vand.u32 2147483647, %v1539
    %vm1593 = vcmp.eq.f32.partialorder %v1592, 8.507059e+37
    %v1594 = vand.u32 %v1539, 2147483648
    %v1595 = vor.u32 1.1754944e-38, %v1594
    %v1596 = vsel %vm1593, %v1595, %v1591
    %v1597 = vmul.f32 1.0, %v1596
    %v1598 = vrcp.pop %v1540
    %v1599 = vmul.f32 %v1540, %v1598
    %v1600 = vsub.f32 1.0, %v1599
    %v1601 = vmul.f32 %v1598, %v1600
    %v1602 = vadd.f32 %v1598, %v1601
    %vm1603 = vweird.f32 %v1540
    %vm1604 = vweird.f32 %v1598
    %vm1605 = vmor %vm1603, %vm1604
    %v1606 = vsel %vm1605, %v1598, %v1602
    %v1607 = vand.u32 2147483647, %v1540
    %vm1608 = vcmp.eq.f32.partialorder %v1607, 8.507059e+37
    %v1609 = vand.u32 %v1540, 2147483648
    %v1610 = vor.u32 1.1754944e-38, %v1609
    %v1611 = vsel %vm1608, %v1610, %v1606
    %v1612 = vmul.f32 1.0, %v1611
    %v1613 = vrcp.pop %v1541
    %v1614 = vmul.f32 %v1541, %v1613
    %v1615 = vsub.f32 1.0, %v1614
    %v1616 = vmul.f32 %v1613, %v1615
    %v1617 = vadd.f32 %v1613, %v1616
    %vm1618 = vweird.f32 %v1541
    %vm1619 = vweird.f32 %v1613
    %vm1620 = vmor %vm1618, %vm1619
    %v1621 = vsel %vm1620, %v1613, %v1617
    %v1622 = vand.u32 2147483647, %v1541
    %vm1623 = vcmp.eq.f32.partialorder %v1622, 8.507059e+37
    %v1624 = vand.u32 %v1541, 2147483648
    %v1625 = vor.u32 1.1754944e-38, %v1624
    %v1626 = vsel %vm1623, %v1625, %v1621
    %v1627 = vmul.f32 1.0, %v1626
    %v1628 = vrcp.pop %v1542
    %v1629 = vmul.f32 %v1542, %v1628
    %v1630 = vsub.f32 1.0, %v1629
    %v1631 = vmul.f32 %v1628, %v1630
    %v1632 = vadd.f32 %v1628, %v1631
    %vm1633 = vweird.f32 %v1542
    %vm1634 = vweird.f32 %v1628
    %vm1635 = vmor %vm1633, %vm1634
    %v1636 = vsel %vm1635, %v1628, %v1632
    %v1637 = vand.u32 2147483647, %v1542
    %vm1638 = vcmp.eq.f32.partialorder %v1637, 8.507059e+37
    %v1639 = vand.u32 %v1542, 2147483648
    %v1640 = vor.u32 1.1754944e-38, %v1639
    %v1641 = vsel %vm1638, %v1640, %v1636
    %v1642 = vmul.f32 1.0, %v1641
    %v1643 = vrcp.pop %v1543
    %v1644 = vmul.f32 %v1543, %v1643
    %v1645 = vsub.f32 1.0, %v1644
    %v1646 = vmul.f32 %v1643, %v1645
    %v1647 = vadd.f32 %v1643, %v1646
    %vm1648 = vweird.f32 %v1543
    %vm1649 = vweird.f32 %v1643
    %vm1650 = vmor %vm1648, %vm1649
    %v1651 = vsel %vm1650, %v1643, %v1647
    %v1652 = vand.u32 2147483647, %v1543
    %vm1653 = vcmp.eq.f32.partialorder %v1652, 8.507059e+37
    %v1654 = vand.u32 %v1543, 2147483648
    %v1655 = vor.u32 1.1754944e-38, %v1654
    %v1656 = vsel %vm1653, %v1655, %v1651
    %v1657 = vmul.f32 1.0, %v1656
    %v1658 = vrcp.pop %v1544
    %v1659 = vmul.f32 %v1544, %v1658
    %v1660 = vsub.f32 1.0, %v1659
    %v1661 = vmul.f32 %v1658, %v1660
    %v1662 = vadd.f32 %v1658, %v1661
    %vm1663 = vweird.f32 %v1544
    %vm1664 = vweird.f32 %v1658
    %vm1665 = vmor %vm1663, %vm1664
    %v1666 = vsel %vm1665, %v1658, %v1662
    %v1667 = vand.u32 2147483647, %v1544
    %vm1668 = vcmp.eq.f32.partialorder %v1667, 8.507059e+37
    %v1669 = vand.u32 %v1544, 2147483648
    %v1670 = vor.u32 1.1754944e-38, %v1669
    %v1671 = vsel %vm1668, %v1670, %v1666
    %v1672 = vmul.f32 1.0, %v1671
    %v1673 = vrcp.pop %v1545
    %v1674 = vmul.f32 %v1545, %v1673
    %v1675 = vsub.f32 1.0, %v1674
    %v1676 = vmul.f32 %v1673, %v1675
    %v1677 = vadd.f32 %v1673, %v1676
    %vm1678 = vweird.f32 %v1545
    %vm1679 = vweird.f32 %v1673
    %vm1680 = vmor %vm1678, %vm1679
    %v1681 = vsel %vm1680, %v1673, %v1677
    %v1682 = vand.u32 2147483647, %v1545
    %vm1683 = vcmp.eq.f32.partialorder %v1682, 8.507059e+37
    %v1684 = vand.u32 %v1545, 2147483648
    %v1685 = vor.u32 1.1754944e-38, %v1684
    %v1686 = vsel %vm1683, %v1685, %v1681
    %v1687 = vmul.f32 1.0, %v1686
    %v1688 = vrcp.pop %v1546
    %v1689 = vmul.f32 %v1546, %v1688
    %v1690 = vsub.f32 1.0, %v1689
    %v1691 = vmul.f32 %v1688, %v1690
    %v1692 = vadd.f32 %v1688, %v1691
    %vm1693 = vweird.f32 %v1546
    %vm1694 = vweird.f32 %v1688
    %vm1695 = vmor %vm1693, %vm1694
    %v1696 = vsel %vm1695, %v1688, %v1692
    %v1697 = vand.u32 2147483647, %v1546
    %vm1698 = vcmp.eq.f32.partialorder %v1697, 8.507059e+37
    %v1699 = vand.u32 %v1546, 2147483648
    %v1700 = vor.u32 1.1754944e-38, %v1699
    %v1701 = vsel %vm1698, %v1700, %v1696
    %v1702 = vmul.f32 1.0, %v1701
    %v1703 = vrcp.pop %v1547
    %v1704 = vmul.f32 %v1547, %v1703
    %v1705 = vsub.f32 1.0, %v1704
    %v1706 = vmul.f32 %v1703, %v1705
    %v1707 = vadd.f32 %v1703, %v1706
    %vm1708 = vweird.f32 %v1547
    %vm1709 = vweird.f32 %v1703
    %vm1710 = vmor %vm1708, %vm1709
    %v1711 = vsel %vm1710, %v1703, %v1707
    %v1712 = vand.u32 2147483647, %v1547
    %vm1713 = vcmp.eq.f32.partialorder %v1712, 8.507059e+37
    %v1714 = vand.u32 %v1547, 2147483648
    %v1715 = vor.u32 1.1754944e-38, %v1714
    %v1716 = vsel %vm1713, %v1715, %v1711
    %v1717 = vmul.f32 1.0, %v1716
    %v1718 = vrcp.pop %v1548
    %v1719 = vmul.f32 %v1548, %v1718
    %v1720 = vsub.f32 1.0, %v1719
    %v1721 = vmul.f32 %v1718, %v1720
    %v1722 = vadd.f32 %v1718, %v1721
    %vm1723 = vweird.f32 %v1548
    %vm1724 = vweird.f32 %v1718
    %vm1725 = vmor %vm1723, %vm1724
    %v1726 = vsel %vm1725, %v1718, %v1722
    %v1727 = vand.u32 2147483647, %v1548
    %vm1728 = vcmp.eq.f32.partialorder %v1727, 8.507059e+37
    %v1729 = vand.u32 %v1548, 2147483648
    %v1730 = vor.u32 1.1754944e-38, %v1729
    %v1731 = vsel %vm1728, %v1730, %v1726
    %v1732 = vmul.f32 1.0, %v1731
    %v1733 = vrcp.pop %v1549
    %v1734 = vmul.f32 %v1549, %v1733
    %v1735 = vsub.f32 1.0, %v1734
    %v1736 = vmul.f32 %v1733, %v1735
    %v1737 = vadd.f32 %v1733, %v1736
    %vm1738 = vweird.f32 %v1549
    %vm1739 = vweird.f32 %v1733
    %vm1740 = vmor %vm1738, %vm1739
    %v1741 = vsel %vm1740, %v1733, %v1737
    %v1742 = vand.u32 2147483647, %v1549
    %vm1743 = vcmp.eq.f32.partialorder %v1742, 8.507059e+37
    %v1744 = vand.u32 %v1549, 2147483648
    %v1745 = vor.u32 1.1754944e-38, %v1744
    %v1746 = vsel %vm1743, %v1745, %v1741
    %v1747 = vmul.f32 1.0, %v1746
    %v1748 = vrcp.pop %v1550
    %v1749 = vmul.f32 %v1550, %v1748
    %v1750 = vsub.f32 1.0, %v1749
    %v1751 = vmul.f32 %v1748, %v1750
    %v1752 = vadd.f32 %v1748, %v1751
    %vm1753 = vweird.f32 %v1550
    %vm1754 = vweird.f32 %v1748
    %vm1755 = vmor %vm1753, %vm1754
    %v1756 = vsel %vm1755, %v1748, %v1752
    %v1757 = vand.u32 2147483647, %v1550
    %vm1758 = vcmp.eq.f32.partialorder %v1757, 8.507059e+37
    %v1759 = vand.u32 %v1550, 2147483648
    %v1760 = vor.u32 1.1754944e-38, %v1759
    %v1761 = vsel %vm1758, %v1760, %v1756
    %v1762 = vmul.f32 1.0, %v1761
    %v1763 = vrcp.pop %v1551
    %v1764 = vmul.f32 %v1551, %v1763
    %v1765 = vsub.f32 1.0, %v1764
    %v1766 = vmul.f32 %v1763, %v1765
    %v1767 = vadd.f32 %v1763, %v1766
    %vm1768 = vweird.f32 %v1551
    %vm1769 = vweird.f32 %v1763
    %vm1770 = vmor %vm1768, %vm1769
    %v1771 = vsel %vm1770, %v1763, %v1767
    %v1772 = vand.u32 2147483647, %v1551
    %vm1773 = vcmp.eq.f32.partialorder %v1772, 8.507059e+37
    %v1774 = vand.u32 %v1551, 2147483648
    %v1775 = vor.u32 1.1754944e-38, %v1774
    %v1776 = vsel %vm1773, %v1775, %v1771
    %v1777 = vmul.f32 1.0, %v1776
    %v1778 = vrcp.pop %v1552
    %v1779 = vmul.f32 %v1552, %v1778
    %v1780 = vsub.f32 1.0, %v1779
    %v1781 = vmul.f32 %v1778, %v1780
    %v1782 = vadd.f32 %v1778, %v1781
    %vm1783 = vweird.f32 %v1552
    %vm1784 = vweird.f32 %v1778
    %vm1785 = vmor %vm1783, %vm1784
    %v1786 = vsel %vm1785, %v1778, %v1782
    %v1787 = vand.u32 2147483647, %v1552
    %vm1788 = vcmp.eq.f32.partialorder %v1787, 8.507059e+37
    %v1789 = vand.u32 %v1552, 2147483648
    %v1790 = vor.u32 1.1754944e-38, %v1789
    %v1791 = vsel %vm1788, %v1790, %v1786
    %v1792 = vmul.f32 1.0, %v1791
    %v1793 = vmul.f32 %v1130, %v1567
    %v1794 = vmul.f32 %v1246, %v1582
    %v1795 = vmul.f32 %v1362, %v1597
    %v1796 = vmul.f32 %v1478, %v1612
    %v1797 = vmul.f32 %v1133, %v1627
    %v1798 = vmul.f32 %v1249, %v1642
    %v1799 = vmul.f32 %v1365, %v1657
    %v1800 = vmul.f32 %v1481, %v1672
    %v1801 = vmul.f32 %v1136, %v1687
    %v1802 = vmul.f32 %v1252, %v1702
    %v1803 = vmul.f32 %v1368, %v1717
    %v1804 = vmul.f32 %v1484, %v1732
    %v1805 = vmul.f32 %v1139, %v1747
    %v1806 = vmul.f32 %v1255, %v1762
    %v1807 = vmul.f32 %v1371, %v1777
    %v1808 = vmul.f32 %v1487, %v1792
    %v1809 = vld [vmem:[#allocation8] sm:$0xff]
    %v1810 = vld [vmem:[#allocation8 + $0x8] sm:$0xff]
    %v1811 = vld [vmem:[#allocation8 + $0x10] sm:$0xff]
    %v1812 = vld [vmem:[#allocation8 + $0x18] sm:$0xff]
    %v1813 = vld [vmem:[#allocation8 + $0x20] sm:$0xff]
    %v1814 = vld [vmem:[#allocation8 + $0x28] sm:$0xff]
    %v1815 = vld [vmem:[#allocation8 + $0x30] sm:$0xff]
    %v1816 = vld [vmem:[#allocation8 + $0x38] sm:$0xff]
    %v1817 = vld [vmem:[#allocation8 + $0x40] sm:$0xff]
    %v1818 = vld [vmem:[#allocation8 + $0x48] sm:$0xff]
    %v1819 = vld [vmem:[#allocation8 + $0x50] sm:$0xff]
    %v1820 = vld [vmem:[#allocation8 + $0x58] sm:$0xff]
    %v1821 = vld [vmem:[#allocation8 + $0x60] sm:$0xff]
    %v1822 = vld [vmem:[#allocation8 + $0x68] sm:$0xff]
    %v1823 = vld [vmem:[#allocation8 + $0x70] sm:$0xff]
    %v1824 = vld [vmem:[#allocation8 + $0x78] sm:$0xff]
    %v1825 = vld [vmem:[#allocation8 + $0x80] sm:$0xff]
    %v1826 = vld [vmem:[#allocation8 + $0x88] sm:$0xff]
    %v1827 = vld [vmem:[#allocation8 + $0x90] sm:$0xff]
    %v1828 = vld [vmem:[#allocation8 + $0x98] sm:$0xff]
    %v1829 = vld [vmem:[#allocation8 + $0xa0] sm:$0xff]
    %v1830 = vld [vmem:[#allocation8 + $0xa8] sm:$0xff]
    %v1831 = vld [vmem:[#allocation8 + $0xb0] sm:$0xff]
    %v1832 = vld [vmem:[#allocation8 + $0xb8] sm:$0xff]
    %v1833 = vld [vmem:[#allocation8 + $0xc0] sm:$0xff]
    %v1834 = vld [vmem:[#allocation8 + $0xc8] sm:$0xff]
    %v1835 = vld [vmem:[#allocation8 + $0xd0] sm:$0xff]
    %v1836 = vld [vmem:[#allocation8 + $0xd8] sm:$0xff]
    %v1837 = vld [vmem:[#allocation8 + $0xe0] sm:$0xff]
    %v1838 = vld [vmem:[#allocation8 + $0xe8] sm:$0xff]
    %v1839 = vld [vmem:[#allocation8 + $0xf0] sm:$0xff]
    %v1840 = vld [vmem:[#allocation8 + $0xf8] sm:$0xff]
    %v1841 = vld [vmem:[#allocation8 + $0x100] sm:$0xff]
    %v1842 = vld [vmem:[#allocation8 + $0x108] sm:$0xff]
    %v1843 = vld [vmem:[#allocation8 + $0x110] sm:$0xff]
    %v1844 = vld [vmem:[#allocation8 + $0x118] sm:$0xff]
    %v1845 = vld [vmem:[#allocation8 + $0x120] sm:$0xff]
    %v1846 = vld [vmem:[#allocation8 + $0x128] sm:$0xff]
    %v1847 = vld [vmem:[#allocation8 + $0x130] sm:$0xff]
    %v1848 = vld [vmem:[#allocation8 + $0x138] sm:$0xff]
    %v1849 = vld [vmem:[#allocation8 + $0x140] sm:$0xff]
    %v1850 = vld [vmem:[#allocation8 + $0x148] sm:$0xff]
    %v1851 = vld [vmem:[#allocation8 + $0x150] sm:$0xff]
    %v1852 = vld [vmem:[#allocation8 + $0x158] sm:$0xff]
    %v1853 = vld [vmem:[#allocation8 + $0x160] sm:$0xff]
    %v1854 = vld [vmem:[#allocation8 + $0x168] sm:$0xff]
    %v1855 = vld [vmem:[#allocation8 + $0x170] sm:$0xff]
    %v1856 = vld [vmem:[#allocation8 + $0x178] sm:$0xff]
    %v1857 = vld [vmem:[#allocation8 + $0x180] sm:$0xff]
    %v1858 = vld [vmem:[#allocation8 + $0x188] sm:$0xff]
    %v1859 = vld [vmem:[#allocation8 + $0x190] sm:$0xff]
    %v1860 = vld [vmem:[#allocation8 + $0x198] sm:$0xff]
    %v1861 = vld [vmem:[#allocation8 + $0x1a0] sm:$0xff]
    %v1862 = vld [vmem:[#allocation8 + $0x1a8] sm:$0xff]
    %v1863 = vld [vmem:[#allocation8 + $0x1b0] sm:$0xff]
    %v1864 = vld [vmem:[#allocation8 + $0x1b8] sm:$0xff]
    %v1865 = vld [vmem:[#allocation8 + $0x1c0] sm:$0xff]
    %v1866 = vld [vmem:[#allocation8 + $0x1c8] sm:$0xff]
    %v1867 = vld [vmem:[#allocation8 + $0x1d0] sm:$0xff]
    %v1868 = vld [vmem:[#allocation8 + $0x1d8] sm:$0xff]
    %v1869 = vld [vmem:[#allocation8 + $0x1e0] sm:$0xff]
    %v1870 = vld [vmem:[#allocation8 + $0x1e8] sm:$0xff]
    %v1871 = vld [vmem:[#allocation8 + $0x1f0] sm:$0xff]
    %v1872 = vld [vmem:[#allocation8 + $0x1f8] sm:$0xff]
    %1873 = vmatpush.msra.mxu0 %v1824
    %1874 = vmatpush.msra.mxu0 %v1823
    %1875 = vmatpush.msra.mxu0 %v1822
    %1876 = vmatpush.msra.mxu0 %v1821
    %1877 = vmatpush.msra.mxu0 %v1820
    %1878 = vmatpush.msra.mxu0 %v1819
    %1879 = vmatpush.msra.mxu0 %v1818
    %1880 = vmatpush.msra.mxu0 %v1817
    %1881 = vmatpush.msra.mxu0 %v1816
    %1882 = vmatpush.msra.mxu0 %v1815
    %1883 = vmatpush.msra.mxu0 %v1814
    %1884 = vmatpush.msra.mxu0 %v1813
    %1885 = vmatpush.msra.mxu0 %v1812
    %1886 = vmatpush.msra.mxu0 %v1811
    %1887 = vmatpush.msra.mxu0 %v1810
    %1888 = vmatpush.msra.mxu0 %v1809
    %1889 = vmatmul.f32.gmra.mxu0 %v1793
    %v1890 = vpop.f32.mrf.mxu0
    %v1891 = vadd.f32 0.0, %v1890
    %1892 = vmatmul.f32.gmra.mxu0 %v1797
    %v1893 = vpop.f32.mrf.mxu0
    %v1894 = vadd.f32 0.0, %v1893
    %1895 = vmatmul.f32.gmra.mxu0 %v1801
    %v1896 = vpop.f32.mrf.mxu0
    %v1897 = vadd.f32 0.0, %v1896
    %1898 = vmatmul.f32.gmra.mxu0 %v1805
    %v1899 = vpop.f32.mrf.mxu0
    %v1900 = vadd.f32 0.0, %v1899
    %1901 = vdwg.mxu0
    %1902 = vmatpush.msra.mxu0 %v1840
    %1903 = vmatpush.msra.mxu0 %v1839
    %1904 = vmatpush.msra.mxu0 %v1838
    %1905 = vmatpush.msra.mxu0 %v1837
    %1906 = vmatpush.msra.mxu0 %v1836
    %1907 = vmatpush.msra.mxu0 %v1835
    %1908 = vmatpush.msra.mxu0 %v1834
    %1909 = vmatpush.msra.mxu0 %v1833
    %1910 = vmatpush.msra.mxu0 %v1832
    %1911 = vmatpush.msra.mxu0 %v1831
    %1912 = vmatpush.msra.mxu0 %v1830
    %1913 = vmatpush.msra.mxu0 %v1829
    %1914 = vmatpush.msra.mxu0 %v1828
    %1915 = vmatpush.msra.mxu0 %v1827
    %1916 = vmatpush.msra.mxu0 %v1826
    %1917 = vmatpush.msra.mxu0 %v1825
    %1918 = vmatmul.f32.gmra.mxu0 %v1794
    %v1919 = vpop.f32.mrf.mxu0
    %v1920 = vadd.f32 %v1891, %v1919
    %1921 = vmatmul.f32.gmra.mxu0 %v1798
    %v1922 = vpop.f32.mrf.mxu0
    %v1923 = vadd.f32 %v1894, %v1922
    %1924 = vmatmul.f32.gmra.mxu0 %v1802
    %v1925 = vpop.f32.mrf.mxu0
    %v1926 = vadd.f32 %v1897, %v1925
    %1927 = vmatmul.f32.gmra.mxu0 %v1806
    %v1928 = vpop.f32.mrf.mxu0
    %v1929 = vadd.f32 %v1900, %v1928
    %1930 = vdwg.mxu0
    %1931 = vmatpush.msra.mxu0 %v1856
    %1932 = vmatpush.msra.mxu0 %v1855
    %1933 = vmatpush.msra.mxu0 %v1854
    %1934 = vmatpush.msra.mxu0 %v1853
    %1935 = vmatpush.msra.mxu0 %v1852
    %1936 = vmatpush.msra.mxu0 %v1851
    %1937 = vmatpush.msra.mxu0 %v1850
    %1938 = vmatpush.msra.mxu0 %v1849
    %1939 = vmatpush.msra.mxu0 %v1848
    %1940 = vmatpush.msra.mxu0 %v1847
    %1941 = vmatpush.msra.mxu0 %v1846
    %1942 = vmatpush.msra.mxu0 %v1845
    %1943 = vmatpush.msra.mxu0 %v1844
    %1944 = vmatpush.msra.mxu0 %v1843
    %1945 = vmatpush.msra.mxu0 %v1842
    %1946 = vmatpush.msra.mxu0 %v1841
    %1947 = vmatmul.f32.gmra.mxu0 %v1795
    %v1948 = vpop.f32.mrf.mxu0
    %v1949 = vadd.f32 %v1920, %v1948
    %1950 = vmatmul.f32.gmra.mxu0 %v1799
    %v1951 = vpop.f32.mrf.mxu0
    %v1952 = vadd.f32 %v1923, %v1951
    %1953 = vmatmul.f32.gmra.mxu0 %v1803
    %v1954 = vpop.f32.mrf.mxu0
    %v1955 = vadd.f32 %v1926, %v1954
    %1956 = vmatmul.f32.gmra.mxu0 %v1807
    %v1957 = vpop.f32.mrf.mxu0
    %v1958 = vadd.f32 %v1929, %v1957
    %1959 = vdwg.mxu0
    %1960 = vmatpush.msra.mxu0 %v1872
    %1961 = vmatpush.msra.mxu0 %v1871
    %1962 = vmatpush.msra.mxu0 %v1870
    %1963 = vmatpush.msra.mxu0 %v1869
    %1964 = vmatpush.msra.mxu0 %v1868
    %1965 = vmatpush.msra.mxu0 %v1867
    %1966 = vmatpush.msra.mxu0 %v1866
    %1967 = vmatpush.msra.mxu0 %v1865
    %1968 = vmatpush.msra.mxu0 %v1864
    %1969 = vmatpush.msra.mxu0 %v1863
    %1970 = vmatpush.msra.mxu0 %v1862
    %1971 = vmatpush.msra.mxu0 %v1861
    %1972 = vmatpush.msra.mxu0 %v1860
    %1973 = vmatpush.msra.mxu0 %v1859
    %1974 = vmatpush.msra.mxu0 %v1858
    %1975 = vmatpush.msra.mxu0 %v1857
    %1976 = vmatmul.f32.gmra.mxu0 %v1796
    %v1977 = vpop.f32.mrf.mxu0
    %v1978 = vadd.f32 %v1949, %v1977
    %1979 = vmatmul.f32.gmra.mxu0 %v1800
    %v1980 = vpop.f32.mrf.mxu0
    %v1981 = vadd.f32 %v1952, %v1980
    %1982 = vmatmul.f32.gmra.mxu0 %v1804
    %v1983 = vpop.f32.mrf.mxu0
    %v1984 = vadd.f32 %v1955, %v1983
    %1985 = vmatmul.f32.gmra.mxu0 %v1808
    %v1986 = vpop.f32.mrf.mxu0
    %v1987 = vadd.f32 %v1958, %v1986
    %1988 = vdwg.mxu0
    %1989 = vst [vmem:[#allocation10] sm:$0xff] %v1978
    %1990 = vst [vmem:[#allocation10 + $0x8] sm:$0xff] %v1981
    %1991 = vst [vmem:[#allocation10 + $0x10] sm:$0xff] %v1984
    %1992 = vst [vmem:[#allocation10 + $0x18] sm:$0xff] %v1987
    // Predicated region
    $region34: #{tpu_custom_call.1} parent=1 // pred_check
      _
    $region35: #{tpu_custom_call.1} parent=1 // pred_check_branch
      %1994 = sbr.rel (0) target = $region37
    $region36: #{tpu_custom_call.1} parent=1 // pred_region
      %1996 = vsyncadd [#allocation4], 0
      %s1997 = sshll.u32 [#allocation10], 4
      %s1998 = int_to_ptr.vmem [resolvable:$true] %s1997
      %s1999 = sshll.u32 %s4, 4
      %s2000 = int_to_ptr.hbm [resolvable:$true] %s1999
      %2005 = dma.vmem_to_hbm [thread:$0]  %s1998, 512, %s2000, [#allocation4], 128, 128, 8
    $region37: #{tpu_custom_call.1} parent=1 // pred_fallthru
      _
    // Predicated region
    $region38: #{tpu_custom_call.1} parent=1 // pred_check
      _
    $region39: #{tpu_custom_call.1} parent=1 // pred_check_branch
      %2007 = sbr.rel (0) target = $region41
    $region40: #{tpu_custom_call.1} parent=1 // pred_region
      %2009 = dma.done [#allocation4], 512
    $region41: #{tpu_custom_call.1} parent=1 // pred_fallthru
      _
    %2010 = vsyncpa [#allocation3], 1
    %2011 = vsyncpa [#allocation6], 1
    %2012 = vsyncpa [#allocation9], 1
    %2013 = vsyncpa [#allocation4], 1

</llo_original>
